<compile_context>
chip_gen: v7x
topology: tpu7x:2x2x1
jax: 0.10.0
libtpu: 0.0.40
codegen_flags: <defaults>
</compile_context>

<pallas_src>
import jax
import jax.numpy as jnp
from jax import lax
from jax.experimental import pallas as pl
from jax.experimental.pallas import tpu as pltpu

EPS = 1e-5
KSIZE = 3
STRIDE = 3


def _fused_kernel(beta_sums_ref,   # SMEM (2,)      [P*sum(beta1), P*sum(beta2)]
                  x_ref,           # VMEM (bs, H*W) flattened input (read once)
                  wbig_ref,        # VMEM (H*W, C*P) structured conv weight (bias-free conv)
                  seg_ref,         # VMEM (C*P, C)  channel-segment summing matrix
                  g1_ref, g2_ref,  # VMEM (1, C)    BatchNorm gammas
                  out_ref):        # VMEM (bs, 2)
    x = x_ref[...]                                                        # (bs, H*W)
    seg = seg_ref[...]                                                    # (C*P, C)

    # conv0 without bias (the bias cancels exactly inside both BatchNorms)
    y = jnp.dot(x, wbig_ref[...], preferred_element_type=jnp.float32)    # (bs, C*P)

    # Single-pass statistics: per-(sample,channel) spatial sums and per-channel sum-of-squares.
    s = jnp.dot(y, seg, preferred_element_type=jnp.float32)              # (bs, C)
    sq = jnp.dot(jnp.sum(y * y, axis=0, keepdims=True), seg,
                 preferred_element_type=jnp.float32)                     # (1, C)

    spatial = y.shape[1] // s.shape[1]                                    # P (static)
    n = float(x.shape[0] * spatial)                                       # N*H'*W' per channel

    mean = jnp.sum(s, axis=0, keepdims=True) / n                          # (1, C)
    var = sq / n - mean * mean                                            # biased variance
    inv_std = lax.rsqrt(var + EPS)                                        # (1, C)

    centered = s - float(spatial) * mean                                  # (bs, C)

    o1 = (jnp.sum(centered * (g1_ref[...] * inv_std), axis=1, keepdims=True)
          + beta_sums_ref[0])                                             # (bs, 1)
    o2 = (-jnp.sum(centered * (g2_ref[...] * inv_std), axis=1, keepdims=True)
          + beta_sums_ref[1])                                             # (bs, 1)

    out_ref[...] = jnp.concatenate([o1, o2], axis=1).astype(out_ref.dtype)


def batchnorm_conv_linear_net(x, params):
    """x: (bs, 1, H, W) float32 NCHW.  Returns (bs, 2) float32."""
    bs, cin, h, w = x.shape
    assert cin == 1, "Conv2d(1, 5, 3, 3) expects a single input channel"
    c_out = params["conv_w"].shape[0]
    oh = (h - KSIZE) // STRIDE + 1
    ow = (w - KSIZE) // STRIDE + 1
    p = oh * ow

    wv = params["conv_w"][:, 0].astype(jnp.float32)                       # (C, 3, 3)

    # Structured conv weight: y_flat(bs, C*P) = x_flat(bs, H*W) @ wbig.
    # wbig[r*W+s, c*P + i*OW + j] = w[c, r-3i, s-3j] when (r,s) lies in patch (i,j), else 0.
    eye_h = jnp.eye(oh, dtype=jnp.float32)
    eye_w = jnp.eye(ow, dtype=jnp.float32)
    region = jnp.einsum("ai,bj,cde->adbecij", eye_h, eye_w, wv)           # (OH,3,OW,3,C,OH,OW)
    region = region.reshape(oh * KSIZE, ow * KSIZE, c_out, p)
    wbig = jnp.zeros((h, w, c_out, p), jnp.float32)
    wbig = wbig.at[:oh * KSIZE, :ow * KSIZE].set(region)
    wbig = wbig.reshape(h * w, c_out * p)

    # Channel-segment summing matrix: column c picks out that channel's P columns of y.
    seg = jnp.repeat(jnp.eye(c_out, dtype=jnp.float32), p, axis=0)        # (C*P, C)

    g1 = params["bn1_w"].reshape(1, c_out).astype(jnp.float32)
    g2 = params["bn2_w"].reshape(1, c_out).astype(jnp.float32)
    # Each sample's output picks up P * sum_c(beta) from the BN shift; fold it here.
    beta_sums = (float(p) * jnp.stack([jnp.sum(params["bn1_b"]),
                                       jnp.sum(params["bn2_b"])])).astype(jnp.float32)

    x2d = x.reshape(bs, h * w)   # free reshape (drops the size-1 channel dim, row-major)

    vmem = pl.BlockSpec(memory_space=pltpu.MemorySpace.VMEM)
    smem = pl.BlockSpec(memory_space=pltpu.MemorySpace.SMEM)

    return pl.pallas_call(
        _fused_kernel,
        out_shape=jax.ShapeDtypeStruct((bs, 2), jnp.float32),
        in_specs=[smem, vmem, vmem, vmem, vmem, vmem],
        out_specs=vmem,
    )(beta_sums, x2d, wbig, seg, g1, g2)


def _reference(x, params):
    """Pure-JAX reference of the PyTorch forward (training-mode batch norm, with conv bias)."""
    y = lax.conv_general_dilated(
        x, params["conv_w"], window_strides=(STRIDE, STRIDE), padding="VALID",
        dimension_numbers=("NCHW", "OIHW", "NCHW"))
    y = y + params["conv_b"].reshape(1, -1, 1, 1)

    def bn2d(t, g, b):
        m = jnp.mean(t, axis=(0, 2, 3), keepdims=True)
        v = jnp.mean((t - m) ** 2, axis=(0, 2, 3), keepdims=True)
        return ((t - m) * lax.rsqrt(v + EPS) * g.reshape(1, -1, 1, 1)
                + b.reshape(1, -1, 1, 1))

    c1 = bn2d(y, params["bn1_w"], params["bn1_b"])
    c2 = bn2d(-y, params["bn2_w"], params["bn2_b"])
    return jnp.stack([c1.sum(axis=(1, 2, 3)), c2.sum(axis=(1, 2, 3))], axis=1)


def init_params(key):
    """Conv2d: PyTorch default kaiming-uniform weight / uniform bias (bound = 1/sqrt(fan_in)).
    BatchNorm defaults are gamma=1, beta=0; we perturb them so the test exercises both affine
    paths (with exact defaults out[:,1] would just be -out[:,0])."""
    k1, k2, k3, k4, k5, k6 = jax.random.split(key, 6)
    fan_in = 1 * KSIZE * KSIZE
    bound = 1.0 / jnp.sqrt(fan_in)
    return {
        "conv_w": jax.random.uniform(k1, (5, 1, KSIZE, KSIZE), jnp.float32, -bound, bound),
        "conv_b": jax.random.uniform(k2, (5,), jnp.float32, -bound, bound),
        "bn1_w": 1.0 + 0.1 * jax.random.normal(k3, (5,), jnp.float32),
        "bn1_b": 0.1 * jax.random.normal(k4, (5,), jnp.float32),
        "bn2_w": 1.0 + 0.1 * jax.random.normal(k5, (5,), jnp.float32),
        "bn2_b": 0.1 * jax.random.normal(k6, (5,), jnp.float32),
    }


if __name__ == "__main__":
    key = jax.random.PRNGKey(0)
    k_x, k_p = jax.random.split(key)

    bs = 4
    x = jax.random.normal(k_x, (bs, 1, 28, 28), jnp.float32)   # NCHW, like PyTorch / MNIST
    params = init_params(k_p)

    out = jax.block_until_ready(batchnorm_conv_linear_net(x, params))
    ref = jax.block_until_ready(_reference(x, params))

    assert out.shape == (bs, 2), out.shape
    assert jnp.allclose(out, ref, atol=1e-4, rtol=1e-4), (out, ref)
    print("KERNEL_OK")
</pallas_src>

<mosaic_0001>
module attributes {stable_mosaic.version = 11 : i64} {
  func.func @_fused_kernel(%arg0: memref<2xf32, #tpu.memory_space<smem>>, %arg1: memref<4x784xf32, #tpu.memory_space<vmem>>, %arg2: memref<784x405xf32, #tpu.memory_space<vmem>>, %arg3: memref<405x5xf32, #tpu.memory_space<vmem>>, %arg4: memref<1x5xf32, #tpu.memory_space<vmem>>, %arg5: memref<1x5xf32, #tpu.memory_space<vmem>>, %arg6: memref<4x2xf32, #tpu.memory_space<vmem>>) attributes {dimension_semantics = [], scalar_prefetch = 0 : i64, scratch_operands = 0 : i64, tpu.core_type = #tpu.core_type<tc>} {
    %c0 = arith.constant 0 : index
    %c0_0 = arith.constant 0 : index
    %0 = vector.load %arg1[%c0, %c0_0] : memref<4x784xf32, #tpu.memory_space<vmem>>, vector<4x784xf32>
    %c0_1 = arith.constant 0 : index
    %c0_2 = arith.constant 0 : index
    %1 = vector.load %arg3[%c0_1, %c0_2] : memref<405x5xf32, #tpu.memory_space<vmem>>, vector<405x5xf32>
    %c0_3 = arith.constant 0 : index
    %c0_4 = arith.constant 0 : index
    %2 = vector.load %arg2[%c0_3, %c0_4] : memref<784x405xf32, #tpu.memory_space<vmem>>, vector<784x405xf32>
    %cst = arith.constant dense<0.000000e+00> : vector<4x405xf32>
    %3 = tpu.matmul %0, %2, %cst {dimension_numbers = #tpu.dot_dimension_numbers<[1], [0], [0], [1], [0, 0, 1, 1], [], []>} : vector<4x784xf32>, vector<784x405xf32>, vector<4x405xf32> -> vector<4x405xf32>
    %cst_5 = arith.constant dense<0.000000e+00> : vector<4x5xf32>
    %4 = tpu.matmul %3, %1, %cst_5 {dimension_numbers = #tpu.dot_dimension_numbers<[1], [0], [0], [1], [0, 0, 1, 1], [], []>} : vector<4x405xf32>, vector<405x5xf32>, vector<4x5xf32> -> vector<4x5xf32>
    %5 = arith.mulf %3, %3 : vector<4x405xf32>
    %cst_6 = arith.constant dense<0.000000e+00> : vector<405xf32>
    %6 = vector.multi_reduction <add>, %5, %cst_6 [0] : vector<4x405xf32> to vector<405xf32>
    %7 = vector.shape_cast %6 : vector<405xf32> to vector<1x405xf32>
    %cst_7 = arith.constant dense<0.000000e+00> : vector<1x5xf32>
    %8 = tpu.matmul %7, %1, %cst_7 {dimension_numbers = #tpu.dot_dimension_numbers<[1], [0], [0], [1], [0, 0, 1, 1], [], []>} : vector<1x405xf32>, vector<405x5xf32>, vector<1x5xf32> -> vector<1x5xf32>
    %cst_8 = arith.constant dense<0.000000e+00> : vector<5xf32>
    %9 = vector.multi_reduction <add>, %4, %cst_8 [0] : vector<4x5xf32> to vector<5xf32>
    %10 = vector.shape_cast %9 : vector<5xf32> to vector<1x5xf32>
    %cst_9 = arith.constant 3.240000e+02 : f32
    %11 = vector.broadcast %cst_9 : f32 to vector<1x5xf32>
    %12 = arith.divf %10, %11 : vector<1x5xf32>
    %cst_10 = arith.constant 3.240000e+02 : f32
    %13 = vector.broadcast %cst_10 : f32 to vector<1x5xf32>
    %14 = arith.divf %8, %13 : vector<1x5xf32>
    %15 = arith.mulf %12, %12 : vector<1x5xf32>
    %16 = arith.subf %14, %15 : vector<1x5xf32>
    %cst_11 = arith.constant 9.99999974E-6 : f32
    %17 = vector.broadcast %cst_11 : f32 to vector<1x5xf32>
    %18 = arith.addf %16, %17 : vector<1x5xf32>
    %19 = math.rsqrt %18 : vector<1x5xf32>
    %cst_12 = arith.constant 8.100000e+01 : f32
    %20 = vector.broadcast %cst_12 : f32 to vector<1x5xf32>
    %21 = arith.mulf %20, %12 : vector<1x5xf32>
    %22 = vector.broadcast %21 : vector<1x5xf32> to vector<4x5xf32>
    %23 = arith.subf %4, %22 : vector<4x5xf32>
    %c0_13 = arith.constant 0 : index
    %c0_14 = arith.constant 0 : index
    %24 = vector.load %arg4[%c0_13, %c0_14] : memref<1x5xf32, #tpu.memory_space<vmem>>, vector<1x5xf32>
    %25 = arith.mulf %24, %19 : vector<1x5xf32>
    %26 = vector.broadcast %25 : vector<1x5xf32> to vector<4x5xf32>
    %27 = arith.mulf %23, %26 : vector<4x5xf32>
    %cst_15 = arith.constant dense<0.000000e+00> : vector<4xf32>
    %28 = vector.multi_reduction <add>, %27, %cst_15 [1] : vector<4x5xf32> to vector<4xf32>
    %29 = vector.shape_cast %28 : vector<4xf32> to vector<4x1xf32>
    %c0_16 = arith.constant 0 : index
    %30 = memref.load %arg0[%c0_16] : memref<2xf32, #tpu.memory_space<smem>>
    %31 = vector.broadcast %30 : f32 to vector<4x1xf32>
    %32 = arith.addf %29, %31 : vector<4x1xf32>
    %c0_17 = arith.constant 0 : index
    %c0_18 = arith.constant 0 : index
    %33 = vector.load %arg5[%c0_17, %c0_18] : memref<1x5xf32, #tpu.memory_space<vmem>>, vector<1x5xf32>
    %34 = arith.mulf %33, %19 : vector<1x5xf32>
    %35 = vector.broadcast %34 : vector<1x5xf32> to vector<4x5xf32>
    %36 = arith.mulf %23, %35 : vector<4x5xf32>
    %cst_19 = arith.constant dense<0.000000e+00> : vector<4xf32>
    %37 = vector.multi_reduction <add>, %36, %cst_19 [1] : vector<4x5xf32> to vector<4xf32>
    %38 = vector.shape_cast %37 : vector<4xf32> to vector<4x1xf32>
    %cst_20 = arith.constant 0.000000e+00 : f32
    %39 = vector.broadcast %cst_20 : f32 to vector<4x1xf32>
    %40 = arith.subf %39, %38 : vector<4x1xf32>
    %c1 = arith.constant 1 : index
    %41 = memref.load %arg0[%c1] : memref<2xf32, #tpu.memory_space<smem>>
    %42 = vector.broadcast %41 : f32 to vector<4x1xf32>
    %43 = arith.addf %40, %42 : vector<4x1xf32>
    %44 = tpu.concatenate %32, %43 in 1 : vector<4x1xf32>, vector<4x1xf32> -> vector<4x2xf32>
    %c0_21 = arith.constant 0 : index
    %c0_22 = arith.constant 0 : index
    %45 = vector.load %arg6[%c0_21, %c0_22] : memref<4x2xf32, #tpu.memory_space<vmem>>, vector<4x2xf32>
    tpu.vector_store %arg6[%c0_21, %c0_22], %44 {strides = array<i32>} : memref<4x2xf32, #tpu.memory_space<vmem>>, vector<4x2xf32>,
    return
  }
}

</mosaic_0001>

<llo_original>
// kernel: tpu_custom_call.1
$region0: #{tpu_custom_call.1}
  #allocation0 [shape = 'u32[]', space=smem, size = 0x4, offset = 0x4, fixed_abs, tag = 'smem constant byte address 0x4 - core index']
  #allocation1 [shape = 'u32[144,128]{1,0:T(1,128)}', space=vmem, size = 0x12000, scoped, tag = 'internal scratch']
  %s0 = inlined_call_operand.vmem [shape: f32[2], index: 0, kind: input, shape index: {}]
  %s1 = inlined_call_operand.vmem [shape: f32[4,784], index: 1, kind: input, shape index: {}]
  %s2 = inlined_call_operand.vmem [shape: f32[784,405], index: 2, kind: input, shape index: {}]
  %s3 = inlined_call_operand.vmem [shape: f32[405,5], index: 3, kind: input, shape index: {}]
  %s4 = inlined_call_operand.vmem [shape: f32[1,5], index: 4, kind: input, shape index: {}]
  %s5 = inlined_call_operand.vmem [shape: f32[1,5], index: 5, kind: input, shape index: {}]
  %s6 = inlined_call_operand.vmem [shape: f32[4,2], index: 6, kind: output, shape index: {}]
  %s7 = sld [smem:[#allocation0]]
  $region38: #{tpu_custom_call.1} parent=0
    _
  %s9 = ssub.s32 1, %s7
  %s10 = scalar_select 0, %s9, %s7
  $region1: #{tpu_custom_call.1} parent=0
    #allocation2 [shape = 'u8[512]{0}', space=smem, size = 0x200, scoped, tag = 'input window, operand 0, single buffered']
    #allocation3 [shape = 's32[1]{0}', space=sflag, size = 0x4, scoped, tag = 'scoped memory for tpu_custom_call.1']
    %11 = vsyncpa [#allocation3], 0
    // Predicated region
    $region2: #{tpu_custom_call.1} parent=1 // pred_check
      _
    $region3: #{tpu_custom_call.1} parent=1 // pred_check_branch
      %13 = sbr.rel (0) target = $region5
    $region4: #{tpu_custom_call.1} parent=1 // pred_region
      %s15 = ssub.s32 16, 16
      %16 = vsyncadd [#allocation3], %s15
      %s18 = sshll.u32 %s0, 4
      %s19 = int_to_ptr.vmem [resolvable:$true] %s18
      %21 = dma.vmem_to_smem %s19, 16, [#allocation2], [#allocation3]
    $region5: #{tpu_custom_call.1} parent=1 // pred_fallthru
      _
    // Predicated region
    $region6: #{tpu_custom_call.1} parent=1 // pred_check
      _
    $region7: #{tpu_custom_call.1} parent=1 // pred_check_branch
      %23 = sbr.rel (0) target = $region9
    $region8: #{tpu_custom_call.1} parent=1 // pred_region
      _
    $region9: #{tpu_custom_call.1} parent=1 // pred_fallthru
      _
    // Predicated region
    $region10: #{tpu_custom_call.1} parent=1 // pred_check
      _
    $region11: #{tpu_custom_call.1} parent=1 // pred_check_branch
      %25 = sbr.rel (0) target = $region13
    $region12: #{tpu_custom_call.1} parent=1 // pred_region
      _
    $region13: #{tpu_custom_call.1} parent=1 // pred_fallthru
      _
    // Predicated region
    $region14: #{tpu_custom_call.1} parent=1 // pred_check
      _
    $region15: #{tpu_custom_call.1} parent=1 // pred_check_branch
      %27 = sbr.rel (0) target = $region17
    $region16: #{tpu_custom_call.1} parent=1 // pred_region
      _
    $region17: #{tpu_custom_call.1} parent=1 // pred_fallthru
      _
    // Predicated region
    $region18: #{tpu_custom_call.1} parent=1 // pred_check
      _
    $region19: #{tpu_custom_call.1} parent=1 // pred_check_branch
      %29 = sbr.rel (0) target = $region21
    $region20: #{tpu_custom_call.1} parent=1 // pred_region
      _
    $region21: #{tpu_custom_call.1} parent=1 // pred_fallthru
      _
    // Predicated region
    $region22: #{tpu_custom_call.1} parent=1 // pred_check
      _
    $region23: #{tpu_custom_call.1} parent=1 // pred_check_branch
      %31 = sbr.rel (0) target = $region25
    $region24: #{tpu_custom_call.1} parent=1 // pred_region
      _
    $region25: #{tpu_custom_call.1} parent=1 // pred_fallthru
      _
    // Predicated region
    $region26: #{tpu_custom_call.1} parent=1 // pred_check
      _
    $region27: #{tpu_custom_call.1} parent=1 // pred_check_branch
      %33 = sbr.rel (0) target = $region29
    $region28: #{tpu_custom_call.1} parent=1 // pred_region
      %34 = dma.done [#allocation3], 16
    $region29: #{tpu_custom_call.1} parent=1 // pred_fallthru
      _
    %35 = sfence
    %v36 = vld [vmem:[%s1] sm:$0xff]
    %v37 = vld [vmem:[%s1 + $0x8] sm:$0xff]
    %v38 = vld [vmem:[%s1 + $0x10] sm:$0xff]
    %v39 = vld [vmem:[%s1 + $0x18] sm:$0xf]
    %v40 = vld [vmem:[%s3] sm:$0xff]
    %v41 = vld [vmem:[%s3 + $0x8] sm:$0xff]
    %v42 = vld [vmem:[%s3 + $0x10] sm:$0xff]
    %v43 = vld [vmem:[%s3 + $0x18] sm:$0xff]
    %v44 = vld [vmem:[%s3 + $0x20] sm:$0xff]
    %v45 = vld [vmem:[%s3 + $0x28] sm:$0xff]
    %v46 = vld [vmem:[%s3 + $0x30] sm:$0xff]
    %v47 = vld [vmem:[%s3 + $0x38] sm:$0xff]
    %v48 = vld [vmem:[%s3 + $0x40] sm:$0xff]
    %v49 = vld [vmem:[%s3 + $0x48] sm:$0xff]
    %v50 = vld [vmem:[%s3 + $0x50] sm:$0xff]
    %v51 = vld [vmem:[%s3 + $0x58] sm:$0xff]
    %v52 = vld [vmem:[%s3 + $0x60] sm:$0xff]
    %v53 = vld [vmem:[%s3 + $0x68] sm:$0xff]
    %v54 = vld [vmem:[%s3 + $0x70] sm:$0xff]
    %v55 = vld [vmem:[%s3 + $0x78] sm:$0xff]
    %v56 = vld [vmem:[%s3 + $0x80] sm:$0xff]
    %v57 = vld [vmem:[%s3 + $0x88] sm:$0xff]
    %v58 = vld [vmem:[%s3 + $0x90] sm:$0xff]
    %v59 = vld [vmem:[%s3 + $0x98] sm:$0xff]
    %v60 = vld [vmem:[%s3 + $0xa0] sm:$0xff]
    %v61 = vld [vmem:[%s3 + $0xa8] sm:$0xff]
    %v62 = vld [vmem:[%s3 + $0xb0] sm:$0xff]
    %v63 = vld [vmem:[%s3 + $0xb8] sm:$0xff]
    %v64 = vld [vmem:[%s3 + $0xc0] sm:$0xff]
    %v65 = vld [vmem:[%s3 + $0xc8] sm:$0xff]
    %v66 = vld [vmem:[%s3 + $0xd0] sm:$0xff]
    %v67 = vld [vmem:[%s3 + $0xd8] sm:$0xff]
    %v68 = vld [vmem:[%s3 + $0xe0] sm:$0xff]
    %v69 = vld [vmem:[%s3 + $0xe8] sm:$0xff]
    %v70 = vld [vmem:[%s3 + $0xf0] sm:$0xff]
    %v71 = vld [vmem:[%s3 + $0xf8] sm:$0xff]
    %v72 = vld [vmem:[%s3 + $0x100] sm:$0xff]
    %v73 = vld [vmem:[%s3 + $0x108] sm:$0xff]
    %v74 = vld [vmem:[%s3 + $0x110] sm:$0xff]
    %v75 = vld [vmem:[%s3 + $0x118] sm:$0xff]
    %v76 = vld [vmem:[%s3 + $0x120] sm:$0xff]
    %v77 = vld [vmem:[%s3 + $0x128] sm:$0xff]
    %v78 = vld [vmem:[%s3 + $0x130] sm:$0xff]
    %v79 = vld [vmem:[%s3 + $0x138] sm:$0xff]
    %v80 = vld [vmem:[%s3 + $0x140] sm:$0xff]
    %v81 = vld [vmem:[%s3 + $0x148] sm:$0xff]
    %v82 = vld [vmem:[%s3 + $0x150] sm:$0xff]
    %v83 = vld [vmem:[%s3 + $0x158] sm:$0xff]
    %v84 = vld [vmem:[%s3 + $0x160] sm:$0xff]
    %v85 = vld [vmem:[%s3 + $0x168] sm:$0xff]
    %v86 = vld [vmem:[%s3 + $0x170] sm:$0xff]
    %v87 = vld [vmem:[%s3 + $0x178] sm:$0xff]
    %v88 = vld [vmem:[%s3 + $0x180] sm:$0xff]
    %v89 = vld [vmem:[%s3 + $0x188] sm:$0xff]
    %v90 = vld [vmem:[%s3 + $0x190] sm:$0x1f]
    %v91 = vld [vmem:[%s2] sm:$0xff]
    %v92 = vld [vmem:[%s2 + $0x8] sm:$0xff]
    %v93 = vld [vmem:[%s2 + $0x10] sm:$0xff]
    %v94 = vld [vmem:[%s2 + $0x18] sm:$0xff]
    %v95 = vld [vmem:[%s2 + $0x20] sm:$0xff]
    %v96 = vld [vmem:[%s2 + $0x28] sm:$0xff]
    %v97 = vld [vmem:[%s2 + $0x30] sm:$0xff]
    %v98 = vld [vmem:[%s2 + $0x38] sm:$0xff]
    %v99 = vld [vmem:[%s2 + $0x40] sm:$0xff]
    %v100 = vld [vmem:[%s2 + $0x48] sm:$0xff]
    %v101 = vld [vmem:[%s2 + $0x50] sm:$0xff]
    %v102 = vld [vmem:[%s2 + $0x58] sm:$0xff]
    %v103 = vld [vmem:[%s2 + $0x60] sm:$0xff]
    %v104 = vld [vmem:[%s2 + $0x68] sm:$0xff]
    %v105 = vld [vmem:[%s2 + $0x70] sm:$0xff]
    %v106 = vld [vmem:[%s2 + $0x78] sm:$0xff]
    %v107 = vld [vmem:[%s2 + $0x80] sm:$0xff]
    %v108 = vld [vmem:[%s2 + $0x88] sm:$0xff]
    %v109 = vld [vmem:[%s2 + $0x90] sm:$0xff]
    %v110 = vld [vmem:[%s2 + $0x98] sm:$0xff]
    %v111 = vld [vmem:[%s2 + $0xa0] sm:$0xff]
    %v112 = vld [vmem:[%s2 + $0xa8] sm:$0xff]
    %v113 = vld [vmem:[%s2 + $0xb0] sm:$0xff]
    %v114 = vld [vmem:[%s2 + $0xb8] sm:$0xff]
    %v115 = vld [vmem:[%s2 + $0xc0] sm:$0xff]
    %v116 = vld [vmem:[%s2 + $0xc8] sm:$0xff]
    %v117 = vld [vmem:[%s2 + $0xd0] sm:$0xff]
    %v118 = vld [vmem:[%s2 + $0xd8] sm:$0xff]
    %v119 = vld [vmem:[%s2 + $0xe0] sm:$0xff]
    %v120 = vld [vmem:[%s2 + $0xe8] sm:$0xff]
    %v121 = vld [vmem:[%s2 + $0xf0] sm:$0xff]
    %v122 = vld [vmem:[%s2 + $0xf8] sm:$0xff]
    %v123 = vld [vmem:[%s2 + $0x100] sm:$0xff]
    %v124 = vld [vmem:[%s2 + $0x108] sm:$0xff]
    %v125 = vld [vmem:[%s2 + $0x110] sm:$0xff]
    %v126 = vld [vmem:[%s2 + $0x118] sm:$0xff]
    %v127 = vld [vmem:[%s2 + $0x120] sm:$0xff]
    %v128 = vld [vmem:[%s2 + $0x128] sm:$0xff]
    %v129 = vld [vmem:[%s2 + $0x130] sm:$0xff]
    %v130 = vld [vmem:[%s2 + $0x138] sm:$0xff]
    %v131 = vld [vmem:[%s2 + $0x140] sm:$0xff]
    %v132 = vld [vmem:[%s2 + $0x148] sm:$0xff]
    %v133 = vld [vmem:[%s2 + $0x150] sm:$0xff]
    %v134 = vld [vmem:[%s2 + $0x158] sm:$0xff]
    %v135 = vld [vmem:[%s2 + $0x160] sm:$0xff]
    %v136 = vld [vmem:[%s2 + $0x168] sm:$0xff]
    %v137 = vld [vmem:[%s2 + $0x170] sm:$0xff]
    %v138 = vld [vmem:[%s2 + $0x178] sm:$0xff]
    %v139 = vld [vmem:[%s2 + $0x180] sm:$0xff]
    %v140 = vld [vmem:[%s2 + $0x188] sm:$0xff]
    %v141 = vld [vmem:[%s2 + $0x190] sm:$0xff]
    %v142 = vld [vmem:[%s2 + $0x198] sm:$0xff]
    %v143 = vld [vmem:[%s2 + $0x1a0] sm:$0xff]
    %v144 = vld [vmem:[%s2 + $0x1a8] sm:$0xff]
    %v145 = vld [vmem:[%s2 + $0x1b0] sm:$0xff]
    %v146 = vld [vmem:[%s2 + $0x1b8] sm:$0xff]
    %v147 = vld [vmem:[%s2 + $0x1c0] sm:$0xff]
    %v148 = vld [vmem:[%s2 + $0x1c8] sm:$0xff]
    %v149 = vld [vmem:[%s2 + $0x1d0] sm:$0xff]
    %v150 = vld [vmem:[%s2 + $0x1d8] sm:$0xff]
    %v151 = vld [vmem:[%s2 + $0x1e0] sm:$0xff]
    %v152 = vld [vmem:[%s2 + $0x1e8] sm:$0xff]
    %v153 = vld [vmem:[%s2 + $0x1f0] sm:$0xff]
    %v154 = vld [vmem:[%s2 + $0x1f8] sm:$0xff]
    %v155 = vld [vmem:[%s2 + $0x200] sm:$0xff]
    %v156 = vld [vmem:[%s2 + $0x208] sm:$0xff]
    %v157 = vld [vmem:[%s2 + $0x210] sm:$0xff]
    %v158 = vld [vmem:[%s2 + $0x218] sm:$0xff]
    %v159 = vld [vmem:[%s2 + $0x220] sm:$0xff]
    %v160 = vld [vmem:[%s2 + $0x228] sm:$0xff]
    %v161 = vld [vmem:[%s2 + $0x230] sm:$0xff]
    %v162 = vld [vmem:[%s2 + $0x238] sm:$0xff]
    %v163 = vld [vmem:[%s2 + $0x240] sm:$0xff]
    %v164 = vld [vmem:[%s2 + $0x248] sm:$0xff]
    %v165 = vld [vmem:[%s2 + $0x250] sm:$0xff]
    %v166 = vld [vmem:[%s2 + $0x258] sm:$0xff]
    %v167 = vld [vmem:[%s2 + $0x260] sm:$0xff]
    %v168 = vld [vmem:[%s2 + $0x268] sm:$0xff]
    %v169 = vld [vmem:[%s2 + $0x270] sm:$0xff]
    %v170 = vld [vmem:[%s2 + $0x278] sm:$0xff]
    %v171 = vld [vmem:[%s2 + $0x280] sm:$0xff]
    %v172 = vld [vmem:[%s2 + $0x288] sm:$0xff]
    %v173 = vld [vmem:[%s2 + $0x290] sm:$0xff]
    %v174 = vld [vmem:[%s2 + $0x298] sm:$0xff]
    %v175 = vld [vmem:[%s2 + $0x2a0] sm:$0xff]
    %v176 = vld [vmem:[%s2 + $0x2a8] sm:$0xff]
    %v177 = vld [vmem:[%s2 + $0x2b0] sm:$0xff]
    %v178 = vld [vmem:[%s2 + $0x2b8] sm:$0xff]
    %v179 = vld [vmem:[%s2 + $0x2c0] sm:$0xff]
    %v180 = vld [vmem:[%s2 + $0x2c8] sm:$0xff]
    %v181 = vld [vmem:[%s2 + $0x2d0] sm:$0xff]
    %v182 = vld [vmem:[%s2 + $0x2d8] sm:$0xff]
    %v183 = vld [vmem:[%s2 + $0x2e0] sm:$0xff]
    %v184 = vld [vmem:[%s2 + $0x2e8] sm:$0xff]
    %v185 = vld [vmem:[%s2 + $0x2f0] sm:$0xff]
    %v186 = vld [vmem:[%s2 + $0x2f8] sm:$0xff]
    %v187 = vld [vmem:[%s2 + $0x300] sm:$0xff]
    %v188 = vld [vmem:[%s2 + $0x308] sm:$0xff]
    %v189 = vld [vmem:[%s2 + $0x310] sm:$0xff]
    %v190 = vld [vmem:[%s2 + $0x318] sm:$0xff]
    %v191 = vld [vmem:[%s2 + $0x320] sm:$0xff]
    %v192 = vld [vmem:[%s2 + $0x328] sm:$0xff]
    %v193 = vld [vmem:[%s2 + $0x330] sm:$0xff]
    %v194 = vld [vmem:[%s2 + $0x338] sm:$0xff]
    %v195 = vld [vmem:[%s2 + $0x340] sm:$0xff]
    %v196 = vld [vmem:[%s2 + $0x348] sm:$0xff]
    %v197 = vld [vmem:[%s2 + $0x350] sm:$0xff]
    %v198 = vld [vmem:[%s2 + $0x358] sm:$0xff]
    %v199 = vld [vmem:[%s2 + $0x360] sm:$0xff]
    %v200 = vld [vmem:[%s2 + $0x368] sm:$0xff]
    %v201 = vld [vmem:[%s2 + $0x370] sm:$0xff]
    %v202 = vld [vmem:[%s2 + $0x378] sm:$0xff]
    %v203 = vld [vmem:[%s2 + $0x380] sm:$0xff]
    %v204 = vld [vmem:[%s2 + $0x388] sm:$0xff]
    %v205 = vld [vmem:[%s2 + $0x390] sm:$0xff]
    %v206 = vld [vmem:[%s2 + $0x398] sm:$0xff]
    %v207 = vld [vmem:[%s2 + $0x3a0] sm:$0xff]
    %v208 = vld [vmem:[%s2 + $0x3a8] sm:$0xff]
    %v209 = vld [vmem:[%s2 + $0x3b0] sm:$0xff]
    %v210 = vld [vmem:[%s2 + $0x3b8] sm:$0xff]
    %v211 = vld [vmem:[%s2 + $0x3c0] sm:$0xff]
    %v212 = vld [vmem:[%s2 + $0x3c8] sm:$0xff]
    %v213 = vld [vmem:[%s2 + $0x3d0] sm:$0xff]
    %v214 = vld [vmem:[%s2 + $0x3d8] sm:$0xff]
    %v215 = vld [vmem:[%s2 + $0x3e0] sm:$0xff]
    %v216 = vld [vmem:[%s2 + $0x3e8] sm:$0xff]
    %v217 = vld [vmem:[%s2 + $0x3f0] sm:$0xff]
    %v218 = vld [vmem:[%s2 + $0x3f8] sm:$0xff]
    %v219 = vld [vmem:[%s2 + $0x400] sm:$0xff]
    %v220 = vld [vmem:[%s2 + $0x408] sm:$0xff]
    %v221 = vld [vmem:[%s2 + $0x410] sm:$0xff]
    %v222 = vld [vmem:[%s2 + $0x418] sm:$0xff]
    %v223 = vld [vmem:[%s2 + $0x420] sm:$0xff]
    %v224 = vld [vmem:[%s2 + $0x428] sm:$0xff]
    %v225 = vld [vmem:[%s2 + $0x430] sm:$0xff]
    %v226 = vld [vmem:[%s2 + $0x438] sm:$0xff]
    %v227 = vld [vmem:[%s2 + $0x440] sm:$0xff]
    %v228 = vld [vmem:[%s2 + $0x448] sm:$0xff]
    %v229 = vld [vmem:[%s2 + $0x450] sm:$0xff]
    %v230 = vld [vmem:[%s2 + $0x458] sm:$0xff]
    %v231 = vld [vmem:[%s2 + $0x460] sm:$0xff]
    %v232 = vld [vmem:[%s2 + $0x468] sm:$0xff]
    %v233 = vld [vmem:[%s2 + $0x470] sm:$0xff]
    %v234 = vld [vmem:[%s2 + $0x478] sm:$0xff]
    %v235 = vld [vmem:[%s2 + $0x480] sm:$0xff]
    %v236 = vld [vmem:[%s2 + $0x488] sm:$0xff]
    %v237 = vld [vmem:[%s2 + $0x490] sm:$0xff]
    %v238 = vld [vmem:[%s2 + $0x498] sm:$0xff]
    %v239 = vld [vmem:[%s2 + $0x4a0] sm:$0xff]
    %v240 = vld [vmem:[%s2 + $0x4a8] sm:$0xff]
    %v241 = vld [vmem:[%s2 + $0x4b0] sm:$0xff]
    %v242 = vld [vmem:[%s2 + $0x4b8] sm:$0xff]
    %v243 = vld [vmem:[%s2 + $0x4c0] sm:$0xff]
    %v244 = vld [vmem:[%s2 + $0x4c8] sm:$0xff]
    %v245 = vld [vmem:[%s2 + $0x4d0] sm:$0xff]
    %v246 = vld [vmem:[%s2 + $0x4d8] sm:$0xff]
    %v247 = vld [vmem:[%s2 + $0x4e0] sm:$0xff]
    %v248 = vld [vmem:[%s2 + $0x4e8] sm:$0xff]
    %v249 = vld [vmem:[%s2 + $0x4f0] sm:$0xff]
    %v250 = vld [vmem:[%s2 + $0x4f8] sm:$0xff]
    %v251 = vld [vmem:[%s2 + $0x500] sm:$0xff]
    %v252 = vld [vmem:[%s2 + $0x508] sm:$0xff]
    %v253 = vld [vmem:[%s2 + $0x510] sm:$0xff]
    %v254 = vld [vmem:[%s2 + $0x518] sm:$0xff]
    %v255 = vld [vmem:[%s2 + $0x520] sm:$0xff]
    %v256 = vld [vmem:[%s2 + $0x528] sm:$0xff]
    %v257 = vld [vmem:[%s2 + $0x530] sm:$0xff]
    %v258 = vld [vmem:[%s2 + $0x538] sm:$0xff]
    %v259 = vld [vmem:[%s2 + $0x540] sm:$0xff]
    %v260 = vld [vmem:[%s2 + $0x548] sm:$0xff]
    %v261 = vld [vmem:[%s2 + $0x550] sm:$0xff]
    %v262 = vld [vmem:[%s2 + $0x558] sm:$0xff]
    %v263 = vld [vmem:[%s2 + $0x560] sm:$0xff]
    %v264 = vld [vmem:[%s2 + $0x568] sm:$0xff]
    %v265 = vld [vmem:[%s2 + $0x570] sm:$0xff]
    %v266 = vld [vmem:[%s2 + $0x578] sm:$0xff]
    %v267 = vld [vmem:[%s2 + $0x580] sm:$0xff]
    %v268 = vld [vmem:[%s2 + $0x588] sm:$0xff]
    %v269 = vld [vmem:[%s2 + $0x590] sm:$0xff]
    %v270 = vld [vmem:[%s2 + $0x598] sm:$0xff]
    %v271 = vld [vmem:[%s2 + $0x5a0] sm:$0xff]
    %v272 = vld [vmem:[%s2 + $0x5a8] sm:$0xff]
    %v273 = vld [vmem:[%s2 + $0x5b0] sm:$0xff]
    %v274 = vld [vmem:[%s2 + $0x5b8] sm:$0xff]
    %v275 = vld [vmem:[%s2 + $0x5c0] sm:$0xff]
    %v276 = vld [vmem:[%s2 + $0x5c8] sm:$0xff]
    %v277 = vld [vmem:[%s2 + $0x5d0] sm:$0xff]
    %v278 = vld [vmem:[%s2 + $0x5d8] sm:$0xff]
    %v279 = vld [vmem:[%s2 + $0x5e0] sm:$0xff]
    %v280 = vld [vmem:[%s2 + $0x5e8] sm:$0xff]
    %v281 = vld [vmem:[%s2 + $0x5f0] sm:$0xff]
    %v282 = vld [vmem:[%s2 + $0x5f8] sm:$0xff]
    %v283 = vld [vmem:[%s2 + $0x600] sm:$0xff]
    %v284 = vld [vmem:[%s2 + $0x608] sm:$0xff]
    %v285 = vld [vmem:[%s2 + $0x610] sm:$0xff]
    %v286 = vld [vmem:[%s2 + $0x618] sm:$0xff]
    %v287 = vld [vmem:[%s2 + $0x620] sm:$0xff]
    %v288 = vld [vmem:[%s2 + $0x628] sm:$0xff]
    %v289 = vld [vmem:[%s2 + $0x630] sm:$0xff]
    %v290 = vld [vmem:[%s2 + $0x638] sm:$0xff]
    %v291 = vld [vmem:[%s2 + $0x640] sm:$0xff]
    %v292 = vld [vmem:[%s2 + $0x648] sm:$0xff]
    %v293 = vld [vmem:[%s2 + $0x650] sm:$0xff]
    %v294 = vld [vmem:[%s2 + $0x658] sm:$0xff]
    %v295 = vld [vmem:[%s2 + $0x660] sm:$0xff]
    %v296 = vld [vmem:[%s2 + $0x668] sm:$0xff]
    %v297 = vld [vmem:[%s2 + $0x670] sm:$0xff]
    %v298 = vld [vmem:[%s2 + $0x678] sm:$0xff]
    %v299 = vld [vmem:[%s2 + $0x680] sm:$0xff]
    %v300 = vld [vmem:[%s2 + $0x688] sm:$0xff]
    %v301 = vld [vmem:[%s2 + $0x690] sm:$0xff]
    %v302 = vld [vmem:[%s2 + $0x698] sm:$0xff]
    %v303 = vld [vmem:[%s2 + $0x6a0] sm:$0xff]
    %v304 = vld [vmem:[%s2 + $0x6a8] sm:$0xff]
    %v305 = vld [vmem:[%s2 + $0x6b0] sm:$0xff]
    %v306 = vld [vmem:[%s2 + $0x6b8] sm:$0xff]
    %v307 = vld [vmem:[%s2 + $0x6c0] sm:$0xff]
    %v308 = vld [vmem:[%s2 + $0x6c8] sm:$0xff]
    %v309 = vld [vmem:[%s2 + $0x6d0] sm:$0xff]
    %v310 = vld [vmem:[%s2 + $0x6d8] sm:$0xff]
    %v311 = vld [vmem:[%s2 + $0x6e0] sm:$0xff]
    %v312 = vld [vmem:[%s2 + $0x6e8] sm:$0xff]
    %v313 = vld [vmem:[%s2 + $0x6f0] sm:$0xff]
    %v314 = vld [vmem:[%s2 + $0x6f8] sm:$0xff]
    %v315 = vld [vmem:[%s2 + $0x700] sm:$0xff]
    %v316 = vld [vmem:[%s2 + $0x708] sm:$0xff]
    %v317 = vld [vmem:[%s2 + $0x710] sm:$0xff]
    %v318 = vld [vmem:[%s2 + $0x718] sm:$0xff]
    %v319 = vld [vmem:[%s2 + $0x720] sm:$0xff]
    %v320 = vld [vmem:[%s2 + $0x728] sm:$0xff]
    %v321 = vld [vmem:[%s2 + $0x730] sm:$0xff]
    %v322 = vld [vmem:[%s2 + $0x738] sm:$0xff]
    %v323 = vld [vmem:[%s2 + $0x740] sm:$0xff]
    %v324 = vld [vmem:[%s2 + $0x748] sm:$0xff]
    %v325 = vld [vmem:[%s2 + $0x750] sm:$0xff]
    %v326 = vld [vmem:[%s2 + $0x758] sm:$0xff]
    %v327 = vld [vmem:[%s2 + $0x760] sm:$0xff]
    %v328 = vld [vmem:[%s2 + $0x768] sm:$0xff]
    %v329 = vld [vmem:[%s2 + $0x770] sm:$0xff]
    %v330 = vld [vmem:[%s2 + $0x778] sm:$0xff]
    %v331 = vld [vmem:[%s2 + $0x780] sm:$0xff]
    %v332 = vld [vmem:[%s2 + $0x788] sm:$0xff]
    %v333 = vld [vmem:[%s2 + $0x790] sm:$0xff]
    %v334 = vld [vmem:[%s2 + $0x798] sm:$0xff]
    %v335 = vld [vmem:[%s2 + $0x7a0] sm:$0xff]
    %v336 = vld [vmem:[%s2 + $0x7a8] sm:$0xff]
    %v337 = vld [vmem:[%s2 + $0x7b0] sm:$0xff]
    %v338 = vld [vmem:[%s2 + $0x7b8] sm:$0xff]
    %v339 = vld [vmem:[%s2 + $0x7c0] sm:$0xff]
    %v340 = vld [vmem:[%s2 + $0x7c8] sm:$0xff]
    %v341 = vld [vmem:[%s2 + $0x7d0] sm:$0xff]
    %v342 = vld [vmem:[%s2 + $0x7d8] sm:$0xff]
    %v343 = vld [vmem:[%s2 + $0x7e0] sm:$0xff]
    %v344 = vld [vmem:[%s2 + $0x7e8] sm:$0xff]
    %v345 = vld [vmem:[%s2 + $0x7f0] sm:$0xff]
    %v346 = vld [vmem:[%s2 + $0x7f8] sm:$0xff]
    %v347 = vld [vmem:[%s2 + $0x800] sm:$0xff]
    %v348 = vld [vmem:[%s2 + $0x808] sm:$0xff]
    %v349 = vld [vmem:[%s2 + $0x810] sm:$0xff]
    %v350 = vld [vmem:[%s2 + $0x818] sm:$0xff]
    %v351 = vld [vmem:[%s2 + $0x820] sm:$0xff]
    %v352 = vld [vmem:[%s2 + $0x828] sm:$0xff]
    %v353 = vld [vmem:[%s2 + $0x830] sm:$0xff]
    %v354 = vld [vmem:[%s2 + $0x838] sm:$0xff]
    %v355 = vld [vmem:[%s2 + $0x840] sm:$0xff]
    %v356 = vld [vmem:[%s2 + $0x848] sm:$0xff]
    %v357 = vld [vmem:[%s2 + $0x850] sm:$0xff]
    %v358 = vld [vmem:[%s2 + $0x858] sm:$0xff]
    %v359 = vld [vmem:[%s2 + $0x860] sm:$0xff]
    %v360 = vld [vmem:[%s2 + $0x868] sm:$0xff]
    %v361 = vld [vmem:[%s2 + $0x870] sm:$0xff]
    %v362 = vld [vmem:[%s2 + $0x878] sm:$0xff]
    %v363 = vld [vmem:[%s2 + $0x880] sm:$0xff]
    %v364 = vld [vmem:[%s2 + $0x888] sm:$0xff]
    %v365 = vld [vmem:[%s2 + $0x890] sm:$0xff]
    %v366 = vld [vmem:[%s2 + $0x898] sm:$0xff]
    %v367 = vld [vmem:[%s2 + $0x8a0] sm:$0xff]
    %v368 = vld [vmem:[%s2 + $0x8a8] sm:$0xff]
    %v369 = vld [vmem:[%s2 + $0x8b0] sm:$0xff]
    %v370 = vld [vmem:[%s2 + $0x8b8] sm:$0xff]
    %v371 = vld [vmem:[%s2 + $0x8c0] sm:$0xff]
    %v372 = vld [vmem:[%s2 + $0x8c8] sm:$0xff]
    %v373 = vld [vmem:[%s2 + $0x8d0] sm:$0xff]
    %v374 = vld [vmem:[%s2 + $0x8d8] sm:$0xff]
    %v375 = vld [vmem:[%s2 + $0x8e0] sm:$0xff]
    %v376 = vld [vmem:[%s2 + $0x8e8] sm:$0xff]
    %v377 = vld [vmem:[%s2 + $0x8f0] sm:$0xff]
    %v378 = vld [vmem:[%s2 + $0x8f8] sm:$0xff]
    %v379 = vld [vmem:[%s2 + $0x900] sm:$0xff]
    %v380 = vld [vmem:[%s2 + $0x908] sm:$0xff]
    %v381 = vld [vmem:[%s2 + $0x910] sm:$0xff]
    %v382 = vld [vmem:[%s2 + $0x918] sm:$0xff]
    %v383 = vld [vmem:[%s2 + $0x920] sm:$0xff]
    %v384 = vld [vmem:[%s2 + $0x928] sm:$0xff]
    %v385 = vld [vmem:[%s2 + $0x930] sm:$0xff]
    %v386 = vld [vmem:[%s2 + $0x938] sm:$0xff]
    %v387 = vld [vmem:[%s2 + $0x940] sm:$0xff]
    %v388 = vld [vmem:[%s2 + $0x948] sm:$0xff]
    %v389 = vld [vmem:[%s2 + $0x950] sm:$0xff]
    %v390 = vld [vmem:[%s2 + $0x958] sm:$0xff]
    %v391 = vld [vmem:[%s2 + $0x960] sm:$0xff]
    %v392 = vld [vmem:[%s2 + $0x968] sm:$0xff]
    %v393 = vld [vmem:[%s2 + $0x970] sm:$0xff]
    %v394 = vld [vmem:[%s2 + $0x978] sm:$0xff]
    %v395 = vld [vmem:[%s2 + $0x980] sm:$0xff]
    %v396 = vld [vmem:[%s2 + $0x988] sm:$0xff]
    %v397 = vld [vmem:[%s2 + $0x990] sm:$0xff]
    %v398 = vld [vmem:[%s2 + $0x998] sm:$0xff]
    %v399 = vld [vmem:[%s2 + $0x9a0] sm:$0xff]
    %v400 = vld [vmem:[%s2 + $0x9a8] sm:$0xff]
    %v401 = vld [vmem:[%s2 + $0x9b0] sm:$0xff]
    %v402 = vld [vmem:[%s2 + $0x9b8] sm:$0xff]
    %v403 = vld [vmem:[%s2 + $0x9c0] sm:$0xff]
    %v404 = vld [vmem:[%s2 + $0x9c8] sm:$0xff]
    %v405 = vld [vmem:[%s2 + $0x9d0] sm:$0xff]
    %v406 = vld [vmem:[%s2 + $0x9d8] sm:$0xff]
    %v407 = vld [vmem:[%s2 + $0x9e0] sm:$0xff]
    %v408 = vld [vmem:[%s2 + $0x9e8] sm:$0xff]
    %v409 = vld [vmem:[%s2 + $0x9f0] sm:$0xff]
    %v410 = vld [vmem:[%s2 + $0x9f8] sm:$0xff]
    %v411 = vld [vmem:[%s2 + $0xa00] sm:$0xff]
    %v412 = vld [vmem:[%s2 + $0xa08] sm:$0xff]
    %v413 = vld [vmem:[%s2 + $0xa10] sm:$0xff]
    %v414 = vld [vmem:[%s2 + $0xa18] sm:$0xff]
    %v415 = vld [vmem:[%s2 + $0xa20] sm:$0xff]
    %v416 = vld [vmem:[%s2 + $0xa28] sm:$0xff]
    %v417 = vld [vmem:[%s2 + $0xa30] sm:$0xff]
    %v418 = vld [vmem:[%s2 + $0xa38] sm:$0xff]
    %v419 = vld [vmem:[%s2 + $0xa40] sm:$0xff]
    %v420 = vld [vmem:[%s2 + $0xa48] sm:$0xff]
    %v421 = vld [vmem:[%s2 + $0xa50] sm:$0xff]
    %v422 = vld [vmem:[%s2 + $0xa58] sm:$0xff]
    %v423 = vld [vmem:[%s2 + $0xa60] sm:$0xff]
    %v424 = vld [vmem:[%s2 + $0xa68] sm:$0xff]
    %v425 = vld [vmem:[%s2 + $0xa70] sm:$0xff]
    %v426 = vld [vmem:[%s2 + $0xa78] sm:$0xff]
    %v427 = vld [vmem:[%s2 + $0xa80] sm:$0xff]
    %v428 = vld [vmem:[%s2 + $0xa88] sm:$0xff]
    %v429 = vld [vmem:[%s2 + $0xa90] sm:$0xff]
    %v430 = vld [vmem:[%s2 + $0xa98] sm:$0xff]
    %v431 = vld [vmem:[%s2 + $0xaa0] sm:$0xff]
    %v432 = vld [vmem:[%s2 + $0xaa8] sm:$0xff]
    %v433 = vld [vmem:[%s2 + $0xab0] sm:$0xff]
    %v434 = vld [vmem:[%s2 + $0xab8] sm:$0xff]
    %v435 = vld [vmem:[%s2 + $0xac0] sm:$0xff]
    %v436 = vld [vmem:[%s2 + $0xac8] sm:$0xff]
    %v437 = vld [vmem:[%s2 + $0xad0] sm:$0xff]
    %v438 = vld [vmem:[%s2 + $0xad8] sm:$0xff]
    %v439 = vld [vmem:[%s2 + $0xae0] sm:$0xff]
    %v440 = vld [vmem:[%s2 + $0xae8] sm:$0xff]
    %v441 = vld [vmem:[%s2 + $0xaf0] sm:$0xff]
    %v442 = vld [vmem:[%s2 + $0xaf8] sm:$0xff]
    %v443 = vld [vmem:[%s2 + $0xb00] sm:$0xff]
    %v444 = vld [vmem:[%s2 + $0xb08] sm:$0xff]
    %v445 = vld [vmem:[%s2 + $0xb10] sm:$0xff]
    %v446 = vld [vmem:[%s2 + $0xb18] sm:$0xff]
    %v447 = vld [vmem:[%s2 + $0xb20] sm:$0xff]
    %v448 = vld [vmem:[%s2 + $0xb28] sm:$0xff]
    %v449 = vld [vmem:[%s2 + $0xb30] sm:$0xff]
    %v450 = vld [vmem:[%s2 + $0xb38] sm:$0xff]
    %v451 = vld [vmem:[%s2 + $0xb40] sm:$0xff]
    %v452 = vld [vmem:[%s2 + $0xb48] sm:$0xff]
    %v453 = vld [vmem:[%s2 + $0xb50] sm:$0xff]
    %v454 = vld [vmem:[%s2 + $0xb58] sm:$0xff]
    %v455 = vld [vmem:[%s2 + $0xb60] sm:$0xff]
    %v456 = vld [vmem:[%s2 + $0xb68] sm:$0xff]
    %v457 = vld [vmem:[%s2 + $0xb70] sm:$0xff]
    %v458 = vld [vmem:[%s2 + $0xb78] sm:$0xff]
    %v459 = vld [vmem:[%s2 + $0xb80] sm:$0xff]
    %v460 = vld [vmem:[%s2 + $0xb88] sm:$0xff]
    %v461 = vld [vmem:[%s2 + $0xb90] sm:$0xff]
    %v462 = vld [vmem:[%s2 + $0xb98] sm:$0xff]
    %v463 = vld [vmem:[%s2 + $0xba0] sm:$0xff]
    %v464 = vld [vmem:[%s2 + $0xba8] sm:$0xff]
    %v465 = vld [vmem:[%s2 + $0xbb0] sm:$0xff]
    %v466 = vld [vmem:[%s2 + $0xbb8] sm:$0xff]
    %v467 = vld [vmem:[%s2 + $0xbc0] sm:$0xff]
    %v468 = vld [vmem:[%s2 + $0xbc8] sm:$0xff]
    %v469 = vld [vmem:[%s2 + $0xbd0] sm:$0xff]
    %v470 = vld [vmem:[%s2 + $0xbd8] sm:$0xff]
    %v471 = vld [vmem:[%s2 + $0xbe0] sm:$0xff]
    %v472 = vld [vmem:[%s2 + $0xbe8] sm:$0xff]
    %v473 = vld [vmem:[%s2 + $0xbf0] sm:$0xff]
    %v474 = vld [vmem:[%s2 + $0xbf8] sm:$0xff]
    %v475 = vld [vmem:[%s2 + $0xc00] sm:$0xff]
    %v476 = vld [vmem:[%s2 + $0xc08] sm:$0xff]
    %v477 = vld [vmem:[%s2 + $0xc10] sm:$0xff]
    %v478 = vld [vmem:[%s2 + $0xc18] sm:$0xff]
    %v479 = vld [vmem:[%s2 + $0xc20] sm:$0xff]
    %v480 = vld [vmem:[%s2 + $0xc28] sm:$0xff]
    %v481 = vld [vmem:[%s2 + $0xc30] sm:$0xff]
    %v482 = vld [vmem:[%s2 + $0xc38] sm:$0xff]
    %v487 = vcombine.high %v36, %v36
    %v488 = vcombine.high %v37, %v37
    %v489 = vcombine.high %v38, %v38
    %vm493 = vcmask 130048
    %v494 = vsel %vm493, %v39, 0
    %496 = vmatprep.subr.mxu0 %v92
    %497 = vmatpush1.msra.mxu0 %v91
    %498 = vmatprep.subr.mxu0 %v96
    %499 = vmatpush1.msra.mxu0 %v95
    %500 = vmatprep.subr.mxu0 %v100
    %501 = vmatpush1.msra.mxu0 %v99
    %502 = vmatprep.subr.mxu0 %v104
    %503 = vmatpush1.msra.mxu0 %v103
    %504 = vmatprep.subr.mxu0 %v108
    %505 = vmatpush1.msra.mxu0 %v107
    %506 = vmatprep.subr.mxu0 %v112
    %507 = vmatpush1.msra.mxu0 %v111
    %508 = vmatprep.subr.mxu0 %v116
    %509 = vmatpush1.msra.mxu0 %v115
    %510 = vmatprep.subr.mxu0 %v120
    %511 = vmatpush1.msra.mxu0 %v119
    %512 = vmatprep.subr.mxu0 %v124
    %513 = vmatpush1.msra.mxu0 %v123
    %514 = vmatprep.subr.mxu0 %v128
    %515 = vmatpush1.msra.mxu0 %v127
    %516 = vmatprep.subr.mxu0 %v132
    %517 = vmatpush1.msra.mxu0 %v131
    %518 = vmatprep.subr.mxu0 %v136
    %519 = vmatpush1.msra.mxu0 %v135
    %520 = vmatprep.subr.mxu0 %v140
    %521 = vmatpush1.msra.mxu0 %v139
    %522 = vmatprep.subr.mxu0 %v144
    %523 = vmatpush1.msra.mxu0 %v143
    %524 = vmatprep.subr.mxu0 %v148
    %525 = vmatpush1.msra.mxu0 %v147
    %526 = vmatprep.subr.mxu0 %v152
    %527 = vmatpush1.msra.mxu0 %v151
    %528 = vmatprep.subr.mxu0 %v156
    %529 = vmatpush1.msra.mxu0 %v155
    %530 = vmatprep.subr.mxu0 %v160
    %531 = vmatpush1.msra.mxu0 %v159
    %532 = vmatprep.subr.mxu0 %v164
    %533 = vmatpush1.msra.mxu0 %v163
    %534 = vmatprep.subr.mxu0 %v168
    %535 = vmatpush1.msra.mxu0 %v167
    %536 = vmatprep.subr.mxu0 %v172
    %537 = vmatpush1.msra.mxu0 %v171
    %538 = vmatprep.subr.mxu0 %v176
    %539 = vmatpush1.msra.mxu0 %v175
    %540 = vmatprep.subr.mxu0 %v180
    %541 = vmatpush1.msra.mxu0 %v179
    %542 = vmatprep.subr.mxu0 %v184
    %543 = vmatpush1.msra.mxu0 %v183
    %544 = vmatprep.subr.mxu0 %v188
    %545 = vmatpush1.msra.mxu0 %v187
    %546 = vmatprep.subr.mxu0 %v192
    %547 = vmatpush1.msra.mxu0 %v191
    %548 = vmatprep.subr.mxu0 %v196
    %549 = vmatpush1.msra.mxu0 %v195
    %550 = vmatprep.subr.mxu0 %v200
    %551 = vmatpush1.msra.mxu0 %v199
    %552 = vmatprep.subr.mxu0 %v204
    %553 = vmatpush1.msra.mxu0 %v203
    %554 = vmatprep.subr.mxu0 %v208
    %555 = vmatpush1.msra.mxu0 %v207
    %556 = vmatprep.subr.mxu0 %v212
    %557 = vmatpush1.msra.mxu0 %v211
    %558 = vmatprep.subr.mxu0 %v216
    %559 = vmatpush1.msra.mxu0 %v215
    %560 = vmatprep.mubr.f32.mxu0 %v487
    %561 = vmatmul.mubr.f32.gmra.mrb[0].mxu0 %v36
    %v562 = vpop.f32.mrb[0].mxu0
    %v563 = vadd.f32 0.0, %v562
    %v564 = vpop.f32.mrb[0].mxu0
    %v565 = vadd.f32 0.0, %v564
    %566 = vdwg.mxu0
    %567 = vmatprep.subr.mxu0 %v220
    %568 = vmatpush1.msra.mxu0 %v219
    %569 = vmatprep.subr.mxu0 %v224
    %570 = vmatpush1.msra.mxu0 %v223
    %571 = vmatprep.subr.mxu0 %v228
    %572 = vmatpush1.msra.mxu0 %v227
    %573 = vmatprep.subr.mxu0 %v232
    %574 = vmatpush1.msra.mxu0 %v231
    %575 = vmatprep.subr.mxu0 %v236
    %576 = vmatpush1.msra.mxu0 %v235
    %577 = vmatprep.subr.mxu0 %v240
    %578 = vmatpush1.msra.mxu0 %v239
    %579 = vmatprep.subr.mxu0 %v244
    %580 = vmatpush1.msra.mxu0 %v243
    %581 = vmatprep.subr.mxu0 %v248
    %582 = vmatpush1.msra.mxu0 %v247
    %583 = vmatprep.subr.mxu0 %v252
    %584 = vmatpush1.msra.mxu0 %v251
    %585 = vmatprep.subr.mxu0 %v256
    %586 = vmatpush1.msra.mxu0 %v255
    %587 = vmatprep.subr.mxu0 %v260
    %588 = vmatpush1.msra.mxu0 %v259
    %589 = vmatprep.subr.mxu0 %v264
    %590 = vmatpush1.msra.mxu0 %v263
    %591 = vmatprep.subr.mxu0 %v268
    %592 = vmatpush1.msra.mxu0 %v267
    %593 = vmatprep.subr.mxu0 %v272
    %594 = vmatpush1.msra.mxu0 %v271
    %595 = vmatprep.subr.mxu0 %v276
    %596 = vmatpush1.msra.mxu0 %v275
    %597 = vmatprep.subr.mxu0 %v280
    %598 = vmatpush1.msra.mxu0 %v279
    %599 = vmatprep.subr.mxu0 %v284
    %600 = vmatpush1.msra.mxu0 %v283
    %601 = vmatprep.subr.mxu0 %v288
    %602 = vmatpush1.msra.mxu0 %v287
    %603 = vmatprep.subr.mxu0 %v292
    %604 = vmatpush1.msra.mxu0 %v291
    %605 = vmatprep.subr.mxu0 %v296
    %606 = vmatpush1.msra.mxu0 %v295
    %607 = vmatprep.subr.mxu0 %v300
    %608 = vmatpush1.msra.mxu0 %v299
    %609 = vmatprep.subr.mxu0 %v304
    %610 = vmatpush1.msra.mxu0 %v303
    %611 = vmatprep.subr.mxu0 %v308
    %612 = vmatpush1.msra.mxu0 %v307
    %613 = vmatprep.subr.mxu0 %v312
    %614 = vmatpush1.msra.mxu0 %v311
    %615 = vmatprep.subr.mxu0 %v316
    %616 = vmatpush1.msra.mxu0 %v315
    %617 = vmatprep.subr.mxu0 %v320
    %618 = vmatpush1.msra.mxu0 %v319
    %619 = vmatprep.subr.mxu0 %v324
    %620 = vmatpush1.msra.mxu0 %v323
    %621 = vmatprep.subr.mxu0 %v328
    %622 = vmatpush1.msra.mxu0 %v327
    %623 = vmatprep.subr.mxu0 %v332
    %624 = vmatpush1.msra.mxu0 %v331
    %625 = vmatprep.subr.mxu0 %v336
    %626 = vmatpush1.msra.mxu0 %v335
    %627 = vmatprep.subr.mxu0 %v340
    %628 = vmatpush1.msra.mxu0 %v339
    %629 = vmatprep.subr.mxu0 %v344
    %630 = vmatpush1.msra.mxu0 %v343
    %631 = vmatprep.mubr.f32.mxu0 %v488
    %632 = vmatmul.mubr.f32.gmra.mrb[0].mxu0 %v37
    %v633 = vpop.f32.mrb[0].mxu0
    %v634 = vadd.f32 %v563, %v633
    %v635 = vpop.f32.mrb[0].mxu0
    %v636 = vadd.f32 %v565, %v635
    %637 = vdwg.mxu0
    %638 = vmatprep.subr.mxu0 %v348
    %639 = vmatpush1.msra.mxu0 %v347
    %640 = vmatprep.subr.mxu0 %v352
    %641 = vmatpush1.msra.mxu0 %v351
    %642 = vmatprep.subr.mxu0 %v356
    %643 = vmatpush1.msra.mxu0 %v355
    %644 = vmatprep.subr.mxu0 %v360
    %645 = vmatpush1.msra.mxu0 %v359
    %646 = vmatprep.subr.mxu0 %v364
    %647 = vmatpush1.msra.mxu0 %v363
    %648 = vmatprep.subr.mxu0 %v368
    %649 = vmatpush1.msra.mxu0 %v367
    %650 = vmatprep.subr.mxu0 %v372
    %651 = vmatpush1.msra.mxu0 %v371
    %652 = vmatprep.subr.mxu0 %v376
    %653 = vmatpush1.msra.mxu0 %v375
    %654 = vmatprep.subr.mxu0 %v380
    %655 = vmatpush1.msra.mxu0 %v379
    %656 = vmatprep.subr.mxu0 %v384
    %657 = vmatpush1.msra.mxu0 %v383
    %658 = vmatprep.subr.mxu0 %v388
    %659 = vmatpush1.msra.mxu0 %v387
    %660 = vmatprep.subr.mxu0 %v392
    %661 = vmatpush1.msra.mxu0 %v391
    %662 = vmatprep.subr.mxu0 %v396
    %663 = vmatpush1.msra.mxu0 %v395
    %664 = vmatprep.subr.mxu0 %v400
    %665 = vmatpush1.msra.mxu0 %v399
    %666 = vmatprep.subr.mxu0 %v404
    %667 = vmatpush1.msra.mxu0 %v403
    %668 = vmatprep.subr.mxu0 %v408
    %669 = vmatpush1.msra.mxu0 %v407
    %670 = vmatprep.subr.mxu0 %v412
    %671 = vmatpush1.msra.mxu0 %v411
    %672 = vmatprep.subr.mxu0 %v416
    %673 = vmatpush1.msra.mxu0 %v415
    %674 = vmatprep.subr.mxu0 %v420
    %675 = vmatpush1.msra.mxu0 %v419
    %676 = vmatprep.subr.mxu0 %v424
    %677 = vmatpush1.msra.mxu0 %v423
    %678 = vmatprep.subr.mxu0 %v428
    %679 = vmatpush1.msra.mxu0 %v427
    %680 = vmatprep.subr.mxu0 %v432
    %681 = vmatpush1.msra.mxu0 %v431
    %682 = vmatprep.subr.mxu0 %v436
    %683 = vmatpush1.msra.mxu0 %v435
    %684 = vmatprep.subr.mxu0 %v440
    %685 = vmatpush1.msra.mxu0 %v439
    %686 = vmatprep.subr.mxu0 %v444
    %687 = vmatpush1.msra.mxu0 %v443
    %688 = vmatprep.subr.mxu0 %v448
    %689 = vmatpush1.msra.mxu0 %v447
    %690 = vmatprep.subr.mxu0 %v452
    %691 = vmatpush1.msra.mxu0 %v451
    %692 = vmatprep.subr.mxu0 %v456
    %693 = vmatpush1.msra.mxu0 %v455
    %694 = vmatprep.subr.mxu0 %v460
    %695 = vmatpush1.msra.mxu0 %v459
    %696 = vmatprep.subr.mxu0 %v464
    %697 = vmatpush1.msra.mxu0 %v463
    %698 = vmatprep.subr.mxu0 %v468
    %699 = vmatpush1.msra.mxu0 %v467
    %700 = vmatprep.subr.mxu0 %v472
    %701 = vmatpush1.msra.mxu0 %v471
    %702 = vmatprep.mubr.f32.mxu0 %v489
    %703 = vmatmul.mubr.f32.gmra.mrb[0].mxu0 %v38
    %v704 = vpop.f32.mrb[0].mxu0
    %v705 = vadd.f32 %v634, %v704
    %v706 = vpop.f32.mrb[0].mxu0
    %v707 = vadd.f32 %v636, %v706
    %708 = vdwg.mxu0
    %709 = vmatprep.subr.mxu0 %v476
    %710 = vmatpush1.msra.mxu0 %v475
    %711 = vmatprep.subr.mxu0 %v480
    %712 = vmatpush1.msra.mxu0 %v479
    %713 = vmatprep.subr.mxu0 0.0
    %714 = vmatpush1.msra.mxu0 0.0
    %715 = vmatprep.subr.mxu0 0.0
    %716 = vmatpush1.msra.mxu0 0.0
    %717 = vmatprep.subr.mxu0 0.0
    %718 = vmatpush1.msra.mxu0 0.0
    %719 = vmatprep.subr.mxu0 0.0
    %720 = vmatpush1.msra.mxu0 0.0
    %721 = vmatprep.subr.mxu0 0.0
    %722 = vmatpush1.msra.mxu0 0.0
    %723 = vmatprep.subr.mxu0 0.0
    %724 = vmatpush1.msra.mxu0 0.0
    %725 = vmatprep.subr.mxu0 0.0
    %726 = vmatpush1.msra.mxu0 0.0
    %727 = vmatprep.subr.mxu0 0.0
    %728 = vmatpush1.msra.mxu0 0.0
    %729 = vmatprep.subr.mxu0 0.0
    %730 = vmatpush1.msra.mxu0 0.0
    %731 = vmatprep.subr.mxu0 0.0
    %732 = vmatpush1.msra.mxu0 0.0
    %733 = vmatprep.subr.mxu0 0.0
    %734 = vmatpush1.msra.mxu0 0.0
    %735 = vmatprep.subr.mxu0 0.0
    %736 = vmatpush1.msra.mxu0 0.0
    %737 = vmatprep.subr.mxu0 0.0
    %738 = vmatpush1.msra.mxu0 0.0
    %739 = vmatprep.subr.mxu0 0.0
    %740 = vmatpush1.msra.mxu0 0.0
    %741 = vmatprep.subr.mxu0 0.0
    %742 = vmatpush1.msra.mxu0 0.0
    %743 = vmatprep.subr.mxu0 0.0
    %744 = vmatpush1.msra.mxu0 0.0
    %745 = vmatprep.subr.mxu0 0.0
    %746 = vmatpush1.msra.mxu0 0.0
    %747 = vmatprep.subr.mxu0 0.0
    %748 = vmatpush1.msra.mxu0 0.0
    %749 = vmatprep.subr.mxu0 0.0
    %750 = vmatpush1.msra.mxu0 0.0
    %751 = vmatprep.subr.mxu0 0.0
    %752 = vmatpush1.msra.mxu0 0.0
    %753 = vmatprep.subr.mxu0 0.0
    %754 = vmatpush1.msra.mxu0 0.0
    %755 = vmatprep.subr.mxu0 0.0
    %756 = vmatpush1.msra.mxu0 0.0
    %757 = vmatprep.subr.mxu0 0.0
    %758 = vmatpush1.msra.mxu0 0.0
    %759 = vmatprep.subr.mxu0 0.0
    %760 = vmatpush1.msra.mxu0 0.0
    %761 = vmatprep.subr.mxu0 0.0
    %762 = vmatpush1.msra.mxu0 0.0
    %763 = vmatprep.subr.mxu0 0.0
    %764 = vmatpush1.msra.mxu0 0.0
    %765 = vmatprep.subr.mxu0 0.0
    %766 = vmatpush1.msra.mxu0 0.0
    %767 = vmatprep.subr.mxu0 0.0
    %768 = vmatpush1.msra.mxu0 0.0
    %769 = vmatprep.subr.mxu0 0.0
    %770 = vmatpush1.msra.mxu0 0.0
    %771 = vmatprep.subr.mxu0 0.0
    %772 = vmatpush1.msra.mxu0 0.0
    %773 = vmatprep.mubr.f32.mxu0 0.0
    %774 = vmatmul.mubr.f32.gmra.mrb[0].mxu0 %v494
    %v775 = vpop.f32.mrb[0].mxu0
    %v776 = vadd.f32 %v705, %v775
    %v777 = vpop.f32.mrb[0].mxu0
    %v778 = vadd.f32 %v707, %v777
    %779 = vdwg.mxu0
    %780 = vmatprep.subr.mxu0 %v94
    %781 = vmatpush1.msra.mxu0 %v93
    %782 = vmatprep.subr.mxu0 %v98
    %783 = vmatpush1.msra.mxu0 %v97
    %784 = vmatprep.subr.mxu0 %v102
    %785 = vmatpush1.msra.mxu0 %v101
    %786 = vmatprep.subr.mxu0 %v106
    %787 = vmatpush1.msra.mxu0 %v105
    %788 = vmatprep.subr.mxu0 %v110
    %789 = vmatpush1.msra.mxu0 %v109
    %790 = vmatprep.subr.mxu0 %v114
    %791 = vmatpush1.msra.mxu0 %v113
    %792 = vmatprep.subr.mxu0 %v118
    %793 = vmatpush1.msra.mxu0 %v117
    %794 = vmatprep.subr.mxu0 %v122
    %795 = vmatpush1.msra.mxu0 %v121
    %796 = vmatprep.subr.mxu0 %v126
    %797 = vmatpush1.msra.mxu0 %v125
    %798 = vmatprep.subr.mxu0 %v130
    %799 = vmatpush1.msra.mxu0 %v129
    %800 = vmatprep.subr.mxu0 %v134
    %801 = vmatpush1.msra.mxu0 %v133
    %802 = vmatprep.subr.mxu0 %v138
    %803 = vmatpush1.msra.mxu0 %v137
    %804 = vmatprep.subr.mxu0 %v142
    %805 = vmatpush1.msra.mxu0 %v141
    %806 = vmatprep.subr.mxu0 %v146
    %807 = vmatpush1.msra.mxu0 %v145
    %808 = vmatprep.subr.mxu0 %v150
    %809 = vmatpush1.msra.mxu0 %v149
    %810 = vmatprep.subr.mxu0 %v154
    %811 = vmatpush1.msra.mxu0 %v153
    %812 = vmatprep.subr.mxu0 %v158
    %813 = vmatpush1.msra.mxu0 %v157
    %814 = vmatprep.subr.mxu0 %v162
    %815 = vmatpush1.msra.mxu0 %v161
    %816 = vmatprep.subr.mxu0 %v166
    %817 = vmatpush1.msra.mxu0 %v165
    %818 = vmatprep.subr.mxu0 %v170
    %819 = vmatpush1.msra.mxu0 %v169
    %820 = vmatprep.subr.mxu0 %v174
    %821 = vmatpush1.msra.mxu0 %v173
    %822 = vmatprep.subr.mxu0 %v178
    %823 = vmatpush1.msra.mxu0 %v177
    %824 = vmatprep.subr.mxu0 %v182
    %825 = vmatpush1.msra.mxu0 %v181
    %826 = vmatprep.subr.mxu0 %v186
    %827 = vmatpush1.msra.mxu0 %v185
    %828 = vmatprep.subr.mxu0 %v190
    %829 = vmatpush1.msra.mxu0 %v189
    %830 = vmatprep.subr.mxu0 %v194
    %831 = vmatpush1.msra.mxu0 %v193
    %832 = vmatprep.subr.mxu0 %v198
    %833 = vmatpush1.msra.mxu0 %v197
    %834 = vmatprep.subr.mxu0 %v202
    %835 = vmatpush1.msra.mxu0 %v201
    %836 = vmatprep.subr.mxu0 %v206
    %837 = vmatpush1.msra.mxu0 %v205
    %838 = vmatprep.subr.mxu0 %v210
    %839 = vmatpush1.msra.mxu0 %v209
    %840 = vmatprep.subr.mxu0 %v214
    %841 = vmatpush1.msra.mxu0 %v213
    %842 = vmatprep.subr.mxu0 %v218
    %843 = vmatpush1.msra.mxu0 %v217
    %844 = vmatprep.mubr.f32.mxu0 %v487
    %845 = vmatmul.mubr.f32.gmra.mrb[0].mxu0 %v36
    %v846 = vpop.f32.mrb[0].mxu0
    %v847 = vadd.f32 0.0, %v846
    %v848 = vpop.f32.mrb[0].mxu0
    %v849 = vadd.f32 0.0, %v848
    %850 = vdwg.mxu0
    %851 = vmatprep.subr.mxu0 %v222
    %852 = vmatpush1.msra.mxu0 %v221
    %853 = vmatprep.subr.mxu0 %v226
    %854 = vmatpush1.msra.mxu0 %v225
    %855 = vmatprep.subr.mxu0 %v230
    %856 = vmatpush1.msra.mxu0 %v229
    %857 = vmatprep.subr.mxu0 %v234
    %858 = vmatpush1.msra.mxu0 %v233
    %859 = vmatprep.subr.mxu0 %v238
    %860 = vmatpush1.msra.mxu0 %v237
    %861 = vmatprep.subr.mxu0 %v242
    %862 = vmatpush1.msra.mxu0 %v241
    %863 = vmatprep.subr.mxu0 %v246
    %864 = vmatpush1.msra.mxu0 %v245
    %865 = vmatprep.subr.mxu0 %v250
    %866 = vmatpush1.msra.mxu0 %v249
    %867 = vmatprep.subr.mxu0 %v254
    %868 = vmatpush1.msra.mxu0 %v253
    %869 = vmatprep.subr.mxu0 %v258
    %870 = vmatpush1.msra.mxu0 %v257
    %871 = vmatprep.subr.mxu0 %v262
    %872 = vmatpush1.msra.mxu0 %v261
    %873 = vmatprep.subr.mxu0 %v266
    %874 = vmatpush1.msra.mxu0 %v265
    %875 = vmatprep.subr.mxu0 %v270
    %876 = vmatpush1.msra.mxu0 %v269
    %877 = vmatprep.subr.mxu0 %v274
    %878 = vmatpush1.msra.mxu0 %v273
    %879 = vmatprep.subr.mxu0 %v278
    %880 = vmatpush1.msra.mxu0 %v277
    %881 = vmatprep.subr.mxu0 %v282
    %882 = vmatpush1.msra.mxu0 %v281
    %883 = vmatprep.subr.mxu0 %v286
    %884 = vmatpush1.msra.mxu0 %v285
    %885 = vmatprep.subr.mxu0 %v290
    %886 = vmatpush1.msra.mxu0 %v289
    %887 = vmatprep.subr.mxu0 %v294
    %888 = vmatpush1.msra.mxu0 %v293
    %889 = vmatprep.subr.mxu0 %v298
    %890 = vmatpush1.msra.mxu0 %v297
    %891 = vmatprep.subr.mxu0 %v302
    %892 = vmatpush1.msra.mxu0 %v301
    %893 = vmatprep.subr.mxu0 %v306
    %894 = vmatpush1.msra.mxu0 %v305
    %895 = vmatprep.subr.mxu0 %v310
    %896 = vmatpush1.msra.mxu0 %v309
    %897 = vmatprep.subr.mxu0 %v314
    %898 = vmatpush1.msra.mxu0 %v313
    %899 = vmatprep.subr.mxu0 %v318
    %900 = vmatpush1.msra.mxu0 %v317
    %901 = vmatprep.subr.mxu0 %v322
    %902 = vmatpush1.msra.mxu0 %v321
    %903 = vmatprep.subr.mxu0 %v326
    %904 = vmatpush1.msra.mxu0 %v325
    %905 = vmatprep.subr.mxu0 %v330
    %906 = vmatpush1.msra.mxu0 %v329
    %907 = vmatprep.subr.mxu0 %v334
    %908 = vmatpush1.msra.mxu0 %v333
    %909 = vmatprep.subr.mxu0 %v338
    %910 = vmatpush1.msra.mxu0 %v337
    %911 = vmatprep.subr.mxu0 %v342
    %912 = vmatpush1.msra.mxu0 %v341
    %913 = vmatprep.subr.mxu0 %v346
    %914 = vmatpush1.msra.mxu0 %v345
    %915 = vmatprep.mubr.f32.mxu0 %v488
    %916 = vmatmul.mubr.f32.gmra.mrb[0].mxu0 %v37
    %v917 = vpop.f32.mrb[0].mxu0
    %v918 = vadd.f32 %v847, %v917
    %v919 = vpop.f32.mrb[0].mxu0
    %v920 = vadd.f32 %v849, %v919
    %921 = vdwg.mxu0
    %922 = vmatprep.subr.mxu0 %v350
    %923 = vmatpush1.msra.mxu0 %v349
    %924 = vmatprep.subr.mxu0 %v354
    %925 = vmatpush1.msra.mxu0 %v353
    %926 = vmatprep.subr.mxu0 %v358
    %927 = vmatpush1.msra.mxu0 %v357
    %928 = vmatprep.subr.mxu0 %v362
    %929 = vmatpush1.msra.mxu0 %v361
    %930 = vmatprep.subr.mxu0 %v366
    %931 = vmatpush1.msra.mxu0 %v365
    %932 = vmatprep.subr.mxu0 %v370
    %933 = vmatpush1.msra.mxu0 %v369
    %934 = vmatprep.subr.mxu0 %v374
    %935 = vmatpush1.msra.mxu0 %v373
    %936 = vmatprep.subr.mxu0 %v378
    %937 = vmatpush1.msra.mxu0 %v377
    %938 = vmatprep.subr.mxu0 %v382
    %939 = vmatpush1.msra.mxu0 %v381
    %940 = vmatprep.subr.mxu0 %v386
    %941 = vmatpush1.msra.mxu0 %v385
    %942 = vmatprep.subr.mxu0 %v390
    %943 = vmatpush1.msra.mxu0 %v389
    %944 = vmatprep.subr.mxu0 %v394
    %945 = vmatpush1.msra.mxu0 %v393
    %946 = vmatprep.subr.mxu0 %v398
    %947 = vmatpush1.msra.mxu0 %v397
    %948 = vmatprep.subr.mxu0 %v402
    %949 = vmatpush1.msra.mxu0 %v401
    %950 = vmatprep.subr.mxu0 %v406
    %951 = vmatpush1.msra.mxu0 %v405
    %952 = vmatprep.subr.mxu0 %v410
    %953 = vmatpush1.msra.mxu0 %v409
    %954 = vmatprep.subr.mxu0 %v414
    %955 = vmatpush1.msra.mxu0 %v413
    %956 = vmatprep.subr.mxu0 %v418
    %957 = vmatpush1.msra.mxu0 %v417
    %958 = vmatprep.subr.mxu0 %v422
    %959 = vmatpush1.msra.mxu0 %v421
    %960 = vmatprep.subr.mxu0 %v426
    %961 = vmatpush1.msra.mxu0 %v425
    %962 = vmatprep.subr.mxu0 %v430
    %963 = vmatpush1.msra.mxu0 %v429
    %964 = vmatprep.subr.mxu0 %v434
    %965 = vmatpush1.msra.mxu0 %v433
    %966 = vmatprep.subr.mxu0 %v438
    %967 = vmatpush1.msra.mxu0 %v437
    %968 = vmatprep.subr.mxu0 %v442
    %969 = vmatpush1.msra.mxu0 %v441
    %970 = vmatprep.subr.mxu0 %v446
    %971 = vmatpush1.msra.mxu0 %v445
    %972 = vmatprep.subr.mxu0 %v450
    %973 = vmatpush1.msra.mxu0 %v449
    %974 = vmatprep.subr.mxu0 %v454
    %975 = vmatpush1.msra.mxu0 %v453
    %976 = vmatprep.subr.mxu0 %v458
    %977 = vmatpush1.msra.mxu0 %v457
    %978 = vmatprep.subr.mxu0 %v462
    %979 = vmatpush1.msra.mxu0 %v461
    %980 = vmatprep.subr.mxu0 %v466
    %981 = vmatpush1.msra.mxu0 %v465
    %982 = vmatprep.subr.mxu0 %v470
    %983 = vmatpush1.msra.mxu0 %v469
    %984 = vmatprep.subr.mxu0 %v474
    %985 = vmatpush1.msra.mxu0 %v473
    %986 = vmatprep.mubr.f32.mxu0 %v489
    %987 = vmatmul.mubr.f32.gmra.mrb[0].mxu0 %v38
    %v988 = vpop.f32.mrb[0].mxu0
    %v989 = vadd.f32 %v918, %v988
    %v990 = vpop.f32.mrb[0].mxu0
    %v991 = vadd.f32 %v920, %v990
    %992 = vdwg.mxu0
    %993 = vmatprep.subr.mxu0 %v478
    %994 = vmatpush1.msra.mxu0 %v477
    %995 = vmatprep.subr.mxu0 %v482
    %996 = vmatpush1.msra.mxu0 %v481
    %997 = vmatprep.subr.mxu0 0.0
    %998 = vmatpush1.msra.mxu0 0.0
    %999 = vmatprep.subr.mxu0 0.0
    %1000 = vmatpush1.msra.mxu0 0.0
    %1001 = vmatprep.subr.mxu0 0.0
    %1002 = vmatpush1.msra.mxu0 0.0
    %1003 = vmatprep.subr.mxu0 0.0
    %1004 = vmatpush1.msra.mxu0 0.0
    %1005 = vmatprep.subr.mxu0 0.0
    %1006 = vmatpush1.msra.mxu0 0.0
    %1007 = vmatprep.subr.mxu0 0.0
    %1008 = vmatpush1.msra.mxu0 0.0
    %1009 = vmatprep.subr.mxu0 0.0
    %1010 = vmatpush1.msra.mxu0 0.0
    %1011 = vmatprep.subr.mxu0 0.0
    %1012 = vmatpush1.msra.mxu0 0.0
    %1013 = vmatprep.subr.mxu0 0.0
    %1014 = vmatpush1.msra.mxu0 0.0
    %1015 = vmatprep.subr.mxu0 0.0
    %1016 = vmatpush1.msra.mxu0 0.0
    %1017 = vmatprep.subr.mxu0 0.0
    %1018 = vmatpush1.msra.mxu0 0.0
    %1019 = vmatprep.subr.mxu0 0.0
    %1020 = vmatpush1.msra.mxu0 0.0
    %1021 = vmatprep.subr.mxu0 0.0
    %1022 = vmatpush1.msra.mxu0 0.0
    %1023 = vmatprep.subr.mxu0 0.0
    %1024 = vmatpush1.msra.mxu0 0.0
    %1025 = vmatprep.subr.mxu0 0.0
    %1026 = vmatpush1.msra.mxu0 0.0
    %1027 = vmatprep.subr.mxu0 0.0
    %1028 = vmatpush1.msra.mxu0 0.0
    %1029 = vmatprep.subr.mxu0 0.0
    %1030 = vmatpush1.msra.mxu0 0.0
    %1031 = vmatprep.subr.mxu0 0.0
    %1032 = vmatpush1.msra.mxu0 0.0
    %1033 = vmatprep.subr.mxu0 0.0
    %1034 = vmatpush1.msra.mxu0 0.0
    %1035 = vmatprep.subr.mxu0 0.0
    %1036 = vmatpush1.msra.mxu0 0.0
    %1037 = vmatprep.subr.mxu0 0.0
    %1038 = vmatpush1.msra.mxu0 0.0
    %1039 = vmatprep.subr.mxu0 0.0
    %1040 = vmatpush1.msra.mxu0 0.0
    %1041 = vmatprep.subr.mxu0 0.0
    %1042 = vmatpush1.msra.mxu0 0.0
    %1043 = vmatprep.subr.mxu0 0.0
    %1044 = vmatpush1.msra.mxu0 0.0
    %1045 = vmatprep.subr.mxu0 0.0
    %1046 = vmatpush1.msra.mxu0 0.0
    %1047 = vmatprep.subr.mxu0 0.0
    %1048 = vmatpush1.msra.mxu0 0.0
    %1049 = vmatprep.subr.mxu0 0.0
    %1050 = vmatpush1.msra.mxu0 0.0
    %1051 = vmatprep.subr.mxu0 0.0
    %1052 = vmatpush1.msra.mxu0 0.0
    %1053 = vmatprep.subr.mxu0 0.0
    %1054 = vmatpush1.msra.mxu0 0.0
    %1055 = vmatprep.subr.mxu0 0.0
    %1056 = vmatpush1.msra.mxu0 0.0
    %1057 = vmatprep.mubr.f32.mxu0 0.0
    %1058 = vmatmul.mubr.f32.gmra.mrb[0].mxu0 %v494
    %v1059 = vpop.f32.mrb[0].mxu0
    %v1060 = vadd.f32 %v989, %v1059
    %v1061 = vpop.f32.mrb[0].mxu0
    %v1062 = vadd.f32 %v991, %v1061
    %1063 = vdwg.mxu0
    %vm1064 = vcmask 171008
    %v1066 = vsel %vm1064, %v1062, 0
    %vm1068 = vcmask 1044480
    %v1070 = vsel %vm1068, %v90, 0
    %1072 = vmatprep.subr.mxu0 0.0
    %1073 = vmatpush1.msra.mxu0 %v40
    %1074 = vmatprep.subr.mxu0 0.0
    %1075 = vmatpush1.msra.mxu0 %v41
    %1076 = vmatprep.subr.mxu0 0.0
    %1077 = vmatpush1.msra.mxu0 %v42
    %1078 = vmatprep.subr.mxu0 0.0
    %1079 = vmatpush1.msra.mxu0 %v43
    %1080 = vmatprep.subr.mxu0 0.0
    %1081 = vmatpush1.msra.mxu0 %v44
    %1082 = vmatprep.subr.mxu0 0.0
    %1083 = vmatpush1.msra.mxu0 %v45
    %1084 = vmatprep.subr.mxu0 0.0
    %1085 = vmatpush1.msra.mxu0 %v46
    %1086 = vmatprep.subr.mxu0 0.0
    %1087 = vmatpush1.msra.mxu0 %v47
    %1088 = vmatprep.subr.mxu0 0.0
    %1089 = vmatpush1.msra.mxu0 %v48
    %1090 = vmatprep.subr.mxu0 0.0
    %1091 = vmatpush1.msra.mxu0 %v49
    %1092 = vmatprep.subr.mxu0 0.0
    %1093 = vmatpush1.msra.mxu0 %v50
    %1094 = vmatprep.subr.mxu0 0.0
    %1095 = vmatpush1.msra.mxu0 %v51
    %1096 = vmatprep.subr.mxu0 0.0
    %1097 = vmatpush1.msra.mxu0 %v52
    %1098 = vmatprep.subr.mxu0 0.0
    %1099 = vmatpush1.msra.mxu0 %v53
    %1100 = vmatprep.subr.mxu0 0.0
    %1101 = vmatpush1.msra.mxu0 %v54
    %1102 = vmatprep.subr.mxu0 0.0
    %1103 = vmatpush1.msra.mxu0 %v55
    %1104 = vmatprep.subr.mxu0 0.0
    %1105 = vmatpush1.msra.mxu0 %v56
    %1106 = vmatprep.subr.mxu0 0.0
    %1107 = vmatpush1.msra.mxu0 %v57
    %1108 = vmatprep.subr.mxu0 0.0
    %1109 = vmatpush1.msra.mxu0 %v58
    %1110 = vmatprep.subr.mxu0 0.0
    %1111 = vmatpush1.msra.mxu0 %v59
    %1112 = vmatprep.subr.mxu0 0.0
    %1113 = vmatpush1.msra.mxu0 %v60
    %1114 = vmatprep.subr.mxu0 0.0
    %1115 = vmatpush1.msra.mxu0 %v61
    %1116 = vmatprep.subr.mxu0 0.0
    %1117 = vmatpush1.msra.mxu0 %v62
    %1118 = vmatprep.subr.mxu0 0.0
    %1119 = vmatpush1.msra.mxu0 %v63
    %1120 = vmatprep.subr.mxu0 0.0
    %1121 = vmatpush1.msra.mxu0 %v64
    %1122 = vmatprep.subr.mxu0 0.0
    %1123 = vmatpush1.msra.mxu0 %v65
    %1124 = vmatprep.subr.mxu0 0.0
    %1125 = vmatpush1.msra.mxu0 %v66
    %1126 = vmatprep.subr.mxu0 0.0
    %1127 = vmatpush1.msra.mxu0 %v67
    %1128 = vmatprep.subr.mxu0 0.0
    %1129 = vmatpush1.msra.mxu0 %v68
    %1130 = vmatprep.subr.mxu0 0.0
    %1131 = vmatpush1.msra.mxu0 %v69
    %1132 = vmatprep.subr.mxu0 0.0
    %1133 = vmatpush1.msra.mxu0 %v70
    %1134 = vmatprep.subr.mxu0 0.0
    %1135 = vmatpush1.msra.mxu0 %v71
    %1136 = vmatprep.mubr.f32.mxu0 %v778
    %1137 = vmatmul.mubr.f32.gmra.mrb[0].mxu0 %v776
    %v1138 = vpop.f32.mrb[0].mxu0
    %v1139 = vadd.f32 0.0, %v1138
    %v1140 = vpop.f32.mrb[0].mxu0
    %1141 = vdwg.mxu0
    %1142 = vmatprep.subr.mxu0 0.0
    %1143 = vmatpush1.msra.mxu0 %v72
    %1144 = vmatprep.subr.mxu0 0.0
    %1145 = vmatpush1.msra.mxu0 %v73
    %1146 = vmatprep.subr.mxu0 0.0
    %1147 = vmatpush1.msra.mxu0 %v74
    %1148 = vmatprep.subr.mxu0 0.0
    %1149 = vmatpush1.msra.mxu0 %v75
    %1150 = vmatprep.subr.mxu0 0.0
    %1151 = vmatpush1.msra.mxu0 %v76
    %1152 = vmatprep.subr.mxu0 0.0
    %1153 = vmatpush1.msra.mxu0 %v77
    %1154 = vmatprep.subr.mxu0 0.0
    %1155 = vmatpush1.msra.mxu0 %v78
    %1156 = vmatprep.subr.mxu0 0.0
    %1157 = vmatpush1.msra.mxu0 %v79
    %1158 = vmatprep.subr.mxu0 0.0
    %1159 = vmatpush1.msra.mxu0 %v80
    %1160 = vmatprep.subr.mxu0 0.0
    %1161 = vmatpush1.msra.mxu0 %v81
    %1162 = vmatprep.subr.mxu0 0.0
    %1163 = vmatpush1.msra.mxu0 %v82
    %1164 = vmatprep.subr.mxu0 0.0
    %1165 = vmatpush1.msra.mxu0 %v83
    %1166 = vmatprep.subr.mxu0 0.0
    %1167 = vmatpush1.msra.mxu0 %v84
    %1168 = vmatprep.subr.mxu0 0.0
    %1169 = vmatpush1.msra.mxu0 %v85
    %1170 = vmatprep.subr.mxu0 0.0
    %1171 = vmatpush1.msra.mxu0 %v86
    %1172 = vmatprep.subr.mxu0 0.0
    %1173 = vmatpush1.msra.mxu0 %v87
    %1174 = vmatprep.subr.mxu0 0.0
    %1175 = vmatpush1.msra.mxu0 %v88
    %1176 = vmatprep.subr.mxu0 0.0
    %1177 = vmatpush1.msra.mxu0 %v89
    %1178 = vmatprep.subr.mxu0 0.0
    %1179 = vmatpush1.msra.mxu0 %v1070
    %1180 = vmatprep.subr.mxu0 0.0
    %1181 = vmatpush1.msra.mxu0 0.0
    %1182 = vmatprep.subr.mxu0 0.0
    %1183 = vmatpush1.msra.mxu0 0.0
    %1184 = vmatprep.subr.mxu0 0.0
    %1185 = vmatpush1.msra.mxu0 0.0
    %1186 = vmatprep.subr.mxu0 0.0
    %1187 = vmatpush1.msra.mxu0 0.0
    %1188 = vmatprep.subr.mxu0 0.0
    %1189 = vmatpush1.msra.mxu0 0.0
    %1190 = vmatprep.subr.mxu0 0.0
    %1191 = vmatpush1.msra.mxu0 0.0
    %1192 = vmatprep.subr.mxu0 0.0
    %1193 = vmatpush1.msra.mxu0 0.0
    %1194 = vmatprep.subr.mxu0 0.0
    %1195 = vmatpush1.msra.mxu0 0.0
    %1196 = vmatprep.subr.mxu0 0.0
    %1197 = vmatpush1.msra.mxu0 0.0
    %1198 = vmatprep.subr.mxu0 0.0
    %1199 = vmatpush1.msra.mxu0 0.0
    %1200 = vmatprep.subr.mxu0 0.0
    %1201 = vmatpush1.msra.mxu0 0.0
    %1202 = vmatprep.subr.mxu0 0.0
    %1203 = vmatpush1.msra.mxu0 0.0
    %1204 = vmatprep.subr.mxu0 0.0
    %1205 = vmatpush1.msra.mxu0 0.0
    %1206 = vmatprep.mubr.f32.mxu0 %v1066
    %1207 = vmatmul.mubr.f32.gmra.mrb[0].mxu0 %v1060
    %v1208 = vpop.f32.mrb[0].mxu0
    %v1209 = vadd.f32 %v1139, %v1208
    %v1210 = vpop.f32.mrb[0].mxu0
    %1211 = vdwg.mxu0
    %v1212 = vmul.f32 %v776, %v776
    %v1213 = vmul.f32 %v778, %v778
    %v1214 = vmul.f32 %v1060, %v1060
    %v1215 = vmul.f32 %v1062, %v1062
    %vm1216 = vcmask 1043456
    %v1217 = vsel %vm1216, %v1212, 0.0
    %v1218 = vrot.slane %v1217, 4
    %v1219 = vadd.f32 %v1217, %v1218
    %v1220 = vrot.slane %v1219, 2
    %v1221 = vadd.f32 %v1219, %v1220
    %v1222 = vrot.slane %v1221, 1
    %v1223 = vadd.f32 %v1221, %v1222
    %v1224 = vsel %vm1216, %v1213, 0.0
    %v1225 = vrot.slane %v1224, 4
    %v1226 = vadd.f32 %v1224, %v1225
    %v1227 = vrot.slane %v1226, 2
    %v1228 = vadd.f32 %v1226, %v1227
    %v1229 = vrot.slane %v1228, 1
    %v1230 = vadd.f32 %v1228, %v1229
    %v1231 = vsel %vm1216, %v1214, 0.0
    %v1232 = vrot.slane %v1231, 4
    %v1233 = vadd.f32 %v1231, %v1232
    %v1234 = vrot.slane %v1233, 2
    %v1235 = vadd.f32 %v1233, %v1234
    %v1236 = vrot.slane %v1235, 1
    %v1237 = vadd.f32 %v1235, %v1236
    %vm1238 = vcmask 166912
    %v1239 = vsel %vm1238, %v1215, 0.0
    %v1240 = vrot.slane %v1239, 4
    %v1241 = vadd.f32 %v1239, %v1240
    %v1242 = vrot.slane %v1241, 2
    %v1243 = vadd.f32 %v1241, %v1242
    %v1244 = vrot.slane %v1243, 1
    %v1245 = vadd.f32 %v1243, %v1244
    %v1247 = vsel %vm1064, %v1245, 0
    %1249 = vmatprep.subr.mxu0 0.0
    %1250 = vmatpush1.msra.mxu0 %v40
    %1251 = vmatprep.subr.mxu0 0.0
    %1252 = vmatpush1.msra.mxu0 %v41
    %1253 = vmatprep.subr.mxu0 0.0
    %1254 = vmatpush1.msra.mxu0 %v42
    %1255 = vmatprep.subr.mxu0 0.0
    %1256 = vmatpush1.msra.mxu0 %v43
    %1257 = vmatprep.subr.mxu0 0.0
    %1258 = vmatpush1.msra.mxu0 %v44
    %1259 = vmatprep.subr.mxu0 0.0
    %1260 = vmatpush1.msra.mxu0 %v45
    %1261 = vmatprep.subr.mxu0 0.0
    %1262 = vmatpush1.msra.mxu0 %v46
    %1263 = vmatprep.subr.mxu0 0.0
    %1264 = vmatpush1.msra.mxu0 %v47
    %1265 = vmatprep.subr.mxu0 0.0
    %1266 = vmatpush1.msra.mxu0 %v48
    %1267 = vmatprep.subr.mxu0 0.0
    %1268 = vmatpush1.msra.mxu0 %v49
    %1269 = vmatprep.subr.mxu0 0.0
    %1270 = vmatpush1.msra.mxu0 %v50
    %1271 = vmatprep.subr.mxu0 0.0
    %1272 = vmatpush1.msra.mxu0 %v51
    %1273 = vmatprep.subr.mxu0 0.0
    %1274 = vmatpush1.msra.mxu0 %v52
    %1275 = vmatprep.subr.mxu0 0.0
    %1276 = vmatpush1.msra.mxu0 %v53
    %1277 = vmatprep.subr.mxu0 0.0
    %1278 = vmatpush1.msra.mxu0 %v54
    %1279 = vmatprep.subr.mxu0 0.0
    %1280 = vmatpush1.msra.mxu0 %v55
    %1281 = vmatprep.subr.mxu0 0.0
    %1282 = vmatpush1.msra.mxu0 %v56
    %1283 = vmatprep.subr.mxu0 0.0
    %1284 = vmatpush1.msra.mxu0 %v57
    %1285 = vmatprep.subr.mxu0 0.0
    %1286 = vmatpush1.msra.mxu0 %v58
    %1287 = vmatprep.subr.mxu0 0.0
    %1288 = vmatpush1.msra.mxu0 %v59
    %1289 = vmatprep.subr.mxu0 0.0
    %1290 = vmatpush1.msra.mxu0 %v60
    %1291 = vmatprep.subr.mxu0 0.0
    %1292 = vmatpush1.msra.mxu0 %v61
    %1293 = vmatprep.subr.mxu0 0.0
    %1294 = vmatpush1.msra.mxu0 %v62
    %1295 = vmatprep.subr.mxu0 0.0
    %1296 = vmatpush1.msra.mxu0 %v63
    %1297 = vmatprep.subr.mxu0 0.0
    %1298 = vmatpush1.msra.mxu0 %v64
    %1299 = vmatprep.subr.mxu0 0.0
    %1300 = vmatpush1.msra.mxu0 %v65
    %1301 = vmatprep.subr.mxu0 0.0
    %1302 = vmatpush1.msra.mxu0 %v66
    %1303 = vmatprep.subr.mxu0 0.0
    %1304 = vmatpush1.msra.mxu0 %v67
    %1305 = vmatprep.subr.mxu0 0.0
    %1306 = vmatpush1.msra.mxu0 %v68
    %1307 = vmatprep.subr.mxu0 0.0
    %1308 = vmatpush1.msra.mxu0 %v69
    %1309 = vmatprep.subr.mxu0 0.0
    %1310 = vmatpush1.msra.mxu0 %v70
    %1311 = vmatprep.subr.mxu0 0.0
    %1312 = vmatpush1.msra.mxu0 %v71
    %1313 = vmatprep.mubr.f32.mxu0 %v1230
    %1314 = vmatmul.mubr.f32.gmra.mrb[0].mxu0 %v1223
    %v1315 = vpop.f32.mrb[0].mxu0
    %v1316 = vadd.f32 0.0, %v1315
    %v1317 = vpop.f32.mrb[0].mxu0
    %1318 = vdwg.mxu0
    %1319 = vmatprep.subr.mxu0 0.0
    %1320 = vmatpush1.msra.mxu0 %v72
    %1321 = vmatprep.subr.mxu0 0.0
    %1322 = vmatpush1.msra.mxu0 %v73
    %1323 = vmatprep.subr.mxu0 0.0
    %1324 = vmatpush1.msra.mxu0 %v74
    %1325 = vmatprep.subr.mxu0 0.0
    %1326 = vmatpush1.msra.mxu0 %v75
    %1327 = vmatprep.subr.mxu0 0.0
    %1328 = vmatpush1.msra.mxu0 %v76
    %1329 = vmatprep.subr.mxu0 0.0
    %1330 = vmatpush1.msra.mxu0 %v77
    %1331 = vmatprep.subr.mxu0 0.0
    %1332 = vmatpush1.msra.mxu0 %v78
    %1333 = vmatprep.subr.mxu0 0.0
    %1334 = vmatpush1.msra.mxu0 %v79
    %1335 = vmatprep.subr.mxu0 0.0
    %1336 = vmatpush1.msra.mxu0 %v80
    %1337 = vmatprep.subr.mxu0 0.0
    %1338 = vmatpush1.msra.mxu0 %v81
    %1339 = vmatprep.subr.mxu0 0.0
    %1340 = vmatpush1.msra.mxu0 %v82
    %1341 = vmatprep.subr.mxu0 0.0
    %1342 = vmatpush1.msra.mxu0 %v83
    %1343 = vmatprep.subr.mxu0 0.0
    %1344 = vmatpush1.msra.mxu0 %v84
    %1345 = vmatprep.subr.mxu0 0.0
    %1346 = vmatpush1.msra.mxu0 %v85
    %1347 = vmatprep.subr.mxu0 0.0
    %1348 = vmatpush1.msra.mxu0 %v86
    %1349 = vmatprep.subr.mxu0 0.0
    %1350 = vmatpush1.msra.mxu0 %v87
    %1351 = vmatprep.subr.mxu0 0.0
    %1352 = vmatpush1.msra.mxu0 %v88
    %1353 = vmatprep.subr.mxu0 0.0
    %1354 = vmatpush1.msra.mxu0 %v89
    %1355 = vmatprep.subr.mxu0 0.0
    %1356 = vmatpush1.msra.mxu0 %v1070
    %1357 = vmatprep.subr.mxu0 0.0
    %1358 = vmatpush1.msra.mxu0 0.0
    %1359 = vmatprep.subr.mxu0 0.0
    %1360 = vmatpush1.msra.mxu0 0.0
    %1361 = vmatprep.subr.mxu0 0.0
    %1362 = vmatpush1.msra.mxu0 0.0
    %1363 = vmatprep.subr.mxu0 0.0
    %1364 = vmatpush1.msra.mxu0 0.0
    %1365 = vmatprep.subr.mxu0 0.0
    %1366 = vmatpush1.msra.mxu0 0.0
    %1367 = vmatprep.subr.mxu0 0.0
    %1368 = vmatpush1.msra.mxu0 0.0
    %1369 = vmatprep.subr.mxu0 0.0
    %1370 = vmatpush1.msra.mxu0 0.0
    %1371 = vmatprep.subr.mxu0 0.0
    %1372 = vmatpush1.msra.mxu0 0.0
    %1373 = vmatprep.subr.mxu0 0.0
    %1374 = vmatpush1.msra.mxu0 0.0
    %1375 = vmatprep.subr.mxu0 0.0
    %1376 = vmatpush1.msra.mxu0 0.0
    %1377 = vmatprep.subr.mxu0 0.0
    %1378 = vmatpush1.msra.mxu0 0.0
    %1379 = vmatprep.subr.mxu0 0.0
    %1380 = vmatpush1.msra.mxu0 0.0
    %1381 = vmatprep.subr.mxu0 0.0
    %1382 = vmatpush1.msra.mxu0 0.0
    %1383 = vmatprep.mubr.f32.mxu0 %v1247
    %1384 = vmatmul.mubr.f32.gmra.mrb[0].mxu0 %v1237
    %v1385 = vpop.f32.mrb[0].mxu0
    %v1386 = vadd.f32 %v1316, %v1385
    %v1387 = vpop.f32.mrb[0].mxu0
    %1388 = vdwg.mxu0
    %vm1389 = vcmask 35840
    %v1390 = vsel %vm1389, %v1209, 0.0
    %v1391 = vrot.slane %v1390, 4
    %v1392 = vadd.f32 %v1390, %v1391
    %v1393 = vrot.slane %v1392, 2
    %v1394 = vadd.f32 %v1392, %v1393
    %v1395 = vrot.slane %v1394, 1
    %v1396 = vadd.f32 %v1394, %v1395
    %v1397 = vrcp.pop 324.0
    %v1398 = vmul.f32 %v1396, %v1397
    %v1399 = vmul.f32 %v1386, %v1397
    %v1400 = vmul.f32 %v1398, %v1398
    %v1401 = vsub.f32 %v1399, %v1400
    %v1402 = vadd.f32 %v1401, 1e-05
    %v1403 = vrsqrt.pop %v1402
    %v1404 = vmul.f32 %v1398, 81.0
    %v1405 = vsub.f32 %v1209, %v1404
    %v1406 = vld [vmem:[%s4] sm:$0x1]
    %v1407 = vmul.f32 %v1406, %v1403
    %v1409 = vlaneseq
    %v1410 = vshrl.u32 %v1409, 7
    %v1411 = vsub.s32 0, %v1410
    %v1412 = vrot.slane %v1407, %v1411
    %v1414 = vmul.f32 %v1405, %v1412
    %v1415 = vsel %vm1389, %v1414, 0.0
    %1416 = vadd.xlane.f32.xlu0 %v1415
    %v1417 = vpop.xlane.xlu0 %1416
    %s1418 = sld [smem:[#allocation2]]
    %v1419 = vstv %s1418
    %v1420 = vadd.f32 %v1417, %v1419
    %v1421 = vld [vmem:[%s5] sm:$0x1]
    %v1422 = vmul.f32 %v1421, %v1403
    %v1424 = vlaneseq
    %v1425 = vshrl.u32 %v1424, 7
    %v1426 = vsub.s32 0, %v1425
    %v1427 = vrot.slane %v1422, %v1426
    %v1429 = vmul.f32 %v1405, %v1427
    %v1430 = vsel %vm1389, %v1429, 0.0
    %1431 = vadd.xlane.f32.xlu0 %v1430
    %v1432 = vpop.xlane.xlu0 %1431
    %v1433 = vsub.f32 0.0, %v1432
    %s1434 = sld [smem:[#allocation2 + $0x1]]
    %v1435 = vstv %s1434
    %v1436 = vadd.f32 %v1433, %v1435
    %vm1437 = vcmask 7168
    %v1438 = vsel %vm1437, %v1420, %v1436
    %vm1439 = vcmask 11264
    %1440 = vst.msk [vmem:[%s6] sm:$0xf] %vm1439, %v1438
    // Predicated region
    $region30: #{tpu_custom_call.1} parent=1 // pred_check
      _
    $region31: #{tpu_custom_call.1} parent=1 // pred_check_branch
      %1442 = sbr.rel (0) target = $region33
    $region32: #{tpu_custom_call.1} parent=1 // pred_region
      _
    $region33: #{tpu_custom_call.1} parent=1 // pred_fallthru
      _
    // Predicated region
    $region34: #{tpu_custom_call.1} parent=1 // pred_check
      _
    $region35: #{tpu_custom_call.1} parent=1 // pred_check_branch
      %1444 = sbr.rel (0) target = $region37
    $region36: #{tpu_custom_call.1} parent=1 // pred_region
      _
    $region37: #{tpu_custom_call.1} parent=1 // pred_fallthru
      _
    %1445 = vsyncpa [#allocation3], 1

</llo_original>
